<compile_context>
chip_gen: v7x
topology: tpu7x:2x2x1
jax: 0.10.0
libtpu: 0.0.40
codegen_flags: <defaults>
</compile_context>

<pallas_src>
import functools

import jax
import jax.numpy as jnp
from jax.experimental import pallas as pl
from jax.experimental.pallas import tpu as pltpu


_VMEM_SPEC = pl.BlockSpec(memory_space=pltpu.MemorySpace.VMEM)


# ----------------------------- kernel helpers -------------------------------

def _edge_pad_hw(t):
    """Replicate-pad by 1 pixel on H (axis 1) and W (axis 2).  t: (N, H, W, C)."""
    t = jnp.concatenate([t[:, :1], t, t[:, -1:]], axis=1)       # H (leading dim)
    t = jnp.concatenate([t[:, :, :1], t, t[:, :, -1:]], axis=2)  # W (sublane dim)
    return t


def _conv3x3_bn(x, w_mat, bias, gamma, beta, *, N, Hp, Wp, Cin, Cout, eps):
    """3x3 replicate-pad conv as ONE im2col MXU matmul + one-pass BatchNorm.

    x:      (N, Hp, Wp, Cin)  activations (kernel value, stays on-chip)
    w_mat:  (9*Cin, Cout)     HWIO weights flattened so k = (dy*3 + dx)*Cin + cin
    Returns (N*Hp*Wp, Cout) float32, normalized with training-mode batch stats.
    """
    xp = _edge_pad_hw(x)                                   # (N, Hp+2, Wp+2, Cin)
    # im2col: 9 shifted windows concatenated along the channel (lane) axis.
    patches = [xp[:, dy:dy + Hp, dx:dx + Wp, :]
               for dy in range(3) for dx in range(3)]
    col = jnp.concatenate(patches, axis=-1)                # (N, Hp, Wp, 9*Cin)
    # Lane dim (9*Cin) unchanged by this flatten -> layout-friendly reshape.
    col = col.reshape(N * Hp * Wp, 9 * Cin)

    # Single MXU matmul for the whole conv, bias folded in as a VPU add.
    y = jnp.dot(col, w_mat, preferred_element_type=jnp.float32) + bias

    # One-pass BatchNorm: sum and sum-of-squares in a single traversal.
    inv_m = 1.0 / float(N * Hp * Wp)
    s = jnp.sum(y, axis=0, keepdims=True)
    ss = jnp.sum(y * y, axis=0, keepdims=True)
    mean = s * inv_m
    var = ss * inv_m - mean * mean                         # biased variance
    return (y - mean) * jax.lax.rsqrt(var + eps) * gamma + beta


# --------------------------------- kernel ------------------------------------

def _down_fused_kernel(x5_ref, w1_ref, b1_ref, g1_ref, be1_ref,
                       w2_ref, b2_ref, g2_ref, be2_ref, o_ref,
                       *, N, Hp, Wp, Cin, Chid, Cout, eps):
    # ---- MaxPool2d(kernel=2, stride=2) --------------------------------------
    # x5 is the NHWC input viewed (free row-major reshape, done in the wrapper)
    # as (N, Hp, 2, Wp, 2*Cin); the trailing 2*Cin axis is
    # [w-even channels | w-odd channels].
    x5 = x5_ref[...]
    m = jnp.maximum(x5[:, :, 0, :, :], x5[:, :, 1, :, :])   # max over H parity
    pooled = jnp.maximum(m[..., :Cin], m[..., Cin:])        # max over W parity
    # pooled: (N, Hp, Wp, Cin)

    # ---- conv1 (3x3 replicate pad) + BN1 — intermediate never leaves VMEM ---
    h = _conv3x3_bn(pooled, w1_ref[...], b1_ref[...], g1_ref[...], be1_ref[...],
                    N=N, Hp=Hp, Wp=Wp, Cin=Cin, Cout=Chid, eps=eps)
    h = h.reshape(N, Hp, Wp, Chid)                          # lane dim unchanged

    # ---- conv2 (3x3 replicate pad) + BN2 + Sigmoid ---------------------------
    y = _conv3x3_bn(h, w2_ref[...], b2_ref[...], g2_ref[...], be2_ref[...],
                    N=N, Hp=Hp, Wp=Wp, Cin=Chid, Cout=Cout, eps=eps)
    # Note: at realistic Cout (>=128) this store is naturally lane-dense; for
    # tiny C one would emit an (N*Hp, Wp*C) slab instead.
    o_ref[...] = jax.nn.sigmoid(y)                          # (N*Hp*Wp, Cout)


# -------------------------------- wrapper -------------------------------------

def down_forward(x_nchw, params, eps=1e-5):
    """Forward pass of `Down` (NCHW in, NCHW out); all compute in one Pallas kernel."""
    x = jnp.transpose(x_nchw, (0, 2, 3, 1)).astype(jnp.float32)   # -> NHWC
    N, H, W, Cin = x.shape
    assert H % 2 == 0 and W % 2 == 0, "MaxPool2d(2,2) path assumes even H, W"
    Hp, Wp = H // 2, W // 2

    Chid = params["w1"].shape[-1]
    Cout = params["w2"].shape[-1]

    # Free row-major reshapes (no data movement): pool-friendly input view and
    # im2col-flattened HWIO weights (k = (dy*3 + dx)*Cin + cin).
    x5 = x.reshape(N, Hp, 2, Wp, 2 * Cin)
    w1 = params["w1"].reshape(9 * Cin, Chid).astype(jnp.float32)
    w2 = params["w2"].reshape(9 * Chid, Cout).astype(jnp.float32)

    kern = functools.partial(_down_fused_kernel, N=N, Hp=Hp, Wp=Wp,
                             Cin=Cin, Chid=Chid, Cout=Cout, eps=eps)

    out = pl.pallas_call(
        kern,
        out_shape=jax.ShapeDtypeStruct((N * Hp * Wp, Cout), jnp.float32),
        in_specs=[_VMEM_SPEC] * 9,
        out_specs=_VMEM_SPEC,
        compiler_params=pltpu.CompilerParams(
            vmem_limit_bytes=32 * 1024 * 1024),   # fits all TPU gens (v7x: 64 MiB phys)
    )(x5, w1,
      params["b1"].reshape(1, -1).astype(jnp.float32),
      params["g1"].reshape(1, -1).astype(jnp.float32),
      params["be1"].reshape(1, -1).astype(jnp.float32),
      w2,
      params["b2"].reshape(1, -1).astype(jnp.float32),
      params["g2"].reshape(1, -1).astype(jnp.float32),
      params["be2"].reshape(1, -1).astype(jnp.float32))

    y = out.reshape(N, Hp, Wp, Cout)
    return jnp.transpose(y, (0, 3, 1, 2))                    # -> NCHW


# ------------------------------ pure-JAX reference -----------------------------

def _reference_down(x_nchw, params, eps=1e-5):
    x = jnp.transpose(x_nchw, (0, 2, 3, 1)).astype(jnp.float32)
    x = jax.lax.reduce_window(x, -jnp.inf, jax.lax.max,
                              (1, 2, 2, 1), (1, 2, 2, 1), "VALID")

    def conv_bn(t, w, b, g, be):
        tp = jnp.pad(t, ((0, 0), (1, 1), (1, 1), (0, 0)), mode="edge")
        y = jax.lax.conv_general_dilated(
            tp, w, window_strides=(1, 1), padding="VALID",
            dimension_numbers=("NHWC", "HWIO", "NHWC"),
            precision=jax.lax.Precision.HIGHEST) + b
        mean = jnp.mean(y, axis=(0, 1, 2), keepdims=True)
        var = jnp.mean(jnp.square(y - mean), axis=(0, 1, 2), keepdims=True)
        return (y - mean) * jax.lax.rsqrt(var + eps) * g + be

    h = conv_bn(x, params["w1"], params["b1"], params["g1"], params["be1"])
    y = conv_bn(h, params["w2"], params["b2"], params["g2"], params["be2"])
    y = jax.nn.sigmoid(y)
    return jnp.transpose(y, (0, 3, 1, 2))


# ---------------------------------- main ---------------------------------------

if __name__ == "__main__":
    key = jax.random.PRNGKey(0)
    kx, k0, k1_, k2_, k3, k4, k5, k6, k7 = jax.random.split(key, 9)

    N, Cin, H, W = 2, 4, 16, 16
    Cout = 8
    Chid = int((Cin + Cout) / 2)  # = 6, matches DoubleConv hidden_channels

    x = jax.random.normal(kx, (N, Cin, H, W), jnp.float32)

    # Deterministic synthetic parameters (HWIO conv weights; PyTorch OIHW maps
    # to this via w.transpose(2, 3, 1, 0)).
    params = {
        "w1": 0.2 * jax.random.normal(k0, (3, 3, Cin, Chid), jnp.float32),
        "b1": 0.1 * jax.random.normal(k1_, (Chid,), jnp.float32),
        "g1": 1.0 + 0.1 * jax.random.normal(k2_, (Chid,), jnp.float32),
        "be1": 0.1 * jax.random.normal(k3, (Chid,), jnp.float32),
        "w2": 0.2 * jax.random.normal(k4, (3, 3, Chid, Cout), jnp.float32),
        "b2": 0.1 * jax.random.normal(k5, (Cout,), jnp.float32),
        "g2": 1.0 + 0.1 * jax.random.normal(k6, (Cout,), jnp.float32),
        "be2": 0.1 * jax.random.normal(k7, (Cout,), jnp.float32),
    }

    y = jax.jit(down_forward)(x, params)
    y = jax.block_until_ready(y)

    assert y.shape == (N, Cout, H // 2, W // 2), y.shape
    assert bool(jnp.all(jnp.isfinite(y)))
    assert bool(jnp.all((y >= 0.0) & (y <= 1.0)))            # sigmoid range

    y_ref = _reference_down(x, params)
    assert bool(jnp.max(jnp.abs(y - y_ref)) < 2e-3)

    print("KERNEL_OK")
</pallas_src>

<mosaic_0001>
module attributes {stable_mosaic.version = 11 : i64} {
  func.func @_down_fused_kernel(%arg0: memref<2x8x2x8x8xf32, #tpu.memory_space<vmem>>, %arg1: memref<36x6xf32, #tpu.memory_space<vmem>>, %arg2: memref<1x6xf32, #tpu.memory_space<vmem>>, %arg3: memref<1x6xf32, #tpu.memory_space<vmem>>, %arg4: memref<1x6xf32, #tpu.memory_space<vmem>>, %arg5: memref<54x8xf32, #tpu.memory_space<vmem>>, %arg6: memref<1x8xf32, #tpu.memory_space<vmem>>, %arg7: memref<1x8xf32, #tpu.memory_space<vmem>>, %arg8: memref<1x8xf32, #tpu.memory_space<vmem>>, %arg9: memref<128x8xf32, #tpu.memory_space<vmem>>) attributes {dimension_semantics = [], scalar_prefetch = 0 : i64, scratch_operands = 0 : i64, tpu.core_type = #tpu.core_type<tc>} {
    %c0 = arith.constant 0 : index
    %c0_0 = arith.constant 0 : index
    %c0_1 = arith.constant 0 : index
    %c0_2 = arith.constant 0 : index
    %c0_3 = arith.constant 0 : index
    %0 = vector.load %arg0[%c0, %c0_0, %c0_1, %c0_2, %c0_3] : memref<2x8x2x8x8xf32, #tpu.memory_space<vmem>>, vector<2x8x2x8x8xf32>
    %1 = vector.extract_strided_slice %0 {offsets = [0, 0, 0, 0, 0], sizes = [2, 8, 1, 8, 8], strides = [1, 1, 1, 1, 1]} : vector<2x8x2x8x8xf32> to vector<2x8x1x8x8xf32>
    %2 = vector.shape_cast %1 : vector<2x8x1x8x8xf32> to vector<2x8x8x8xf32>
    %3 = vector.extract_strided_slice %0 {offsets = [0, 0, 1, 0, 0], sizes = [2, 8, 1, 8, 8], strides = [1, 1, 1, 1, 1]} : vector<2x8x2x8x8xf32> to vector<2x8x1x8x8xf32>
    %4 = vector.shape_cast %3 : vector<2x8x1x8x8xf32> to vector<2x8x8x8xf32>
    %5 = arith.maximumf %2, %4 : vector<2x8x8x8xf32>
    %6 = vector.extract_strided_slice %5 {offsets = [0, 0, 0, 0], sizes = [2, 8, 8, 4], strides = [1, 1, 1, 1]} : vector<2x8x8x8xf32> to vector<2x8x8x4xf32>
    %7 = vector.extract_strided_slice %5 {offsets = [0, 0, 0, 4], sizes = [2, 8, 8, 4], strides = [1, 1, 1, 1]} : vector<2x8x8x8xf32> to vector<2x8x8x4xf32>
    %8 = arith.maximumf %6, %7 : vector<2x8x8x4xf32>
    %c0_4 = arith.constant 0 : index
    %c0_5 = arith.constant 0 : index
    %9 = vector.load %arg1[%c0_4, %c0_5] : memref<36x6xf32, #tpu.memory_space<vmem>>, vector<36x6xf32>
    %c0_6 = arith.constant 0 : index
    %c0_7 = arith.constant 0 : index
    %10 = vector.load %arg2[%c0_6, %c0_7] : memref<1x6xf32, #tpu.memory_space<vmem>>, vector<1x6xf32>
    %c0_8 = arith.constant 0 : index
    %c0_9 = arith.constant 0 : index
    %11 = vector.load %arg3[%c0_8, %c0_9] : memref<1x6xf32, #tpu.memory_space<vmem>>, vector<1x6xf32>
    %c0_10 = arith.constant 0 : index
    %c0_11 = arith.constant 0 : index
    %12 = vector.load %arg4[%c0_10, %c0_11] : memref<1x6xf32, #tpu.memory_space<vmem>>, vector<1x6xf32>
    %13 = vector.extract_strided_slice %8 {offsets = [0, 0, 0, 0], sizes = [2, 1, 8, 4], strides = [1, 1, 1, 1]} : vector<2x8x8x4xf32> to vector<2x1x8x4xf32>
    %14 = vector.extract_strided_slice %8 {offsets = [0, 7, 0, 0], sizes = [2, 1, 8, 4], strides = [1, 1, 1, 1]} : vector<2x8x8x4xf32> to vector<2x1x8x4xf32>
    %15 = tpu.concatenate %13, %8, %14 in 1 : vector<2x1x8x4xf32>, vector<2x8x8x4xf32>, vector<2x1x8x4xf32> -> vector<2x10x8x4xf32>
    %16 = vector.extract_strided_slice %15 {offsets = [0, 0, 0, 0], sizes = [2, 10, 1, 4], strides = [1, 1, 1, 1]} : vector<2x10x8x4xf32> to vector<2x10x1x4xf32>
    %17 = vector.extract_strided_slice %15 {offsets = [0, 0, 7, 0], sizes = [2, 10, 1, 4], strides = [1, 1, 1, 1]} : vector<2x10x8x4xf32> to vector<2x10x1x4xf32>
    %18 = tpu.concatenate %16, %15, %17 in 2 : vector<2x10x1x4xf32>, vector<2x10x8x4xf32>, vector<2x10x1x4xf32> -> vector<2x10x10x4xf32>
    %19 = vector.extract_strided_slice %18 {offsets = [0, 0, 0, 0], sizes = [2, 8, 8, 4], strides = [1, 1, 1, 1]} : vector<2x10x10x4xf32> to vector<2x8x8x4xf32>
    %20 = vector.extract_strided_slice %18 {offsets = [0, 0, 1, 0], sizes = [2, 8, 8, 4], strides = [1, 1, 1, 1]} : vector<2x10x10x4xf32> to vector<2x8x8x4xf32>
    %21 = vector.extract_strided_slice %18 {offsets = [0, 0, 2, 0], sizes = [2, 8, 8, 4], strides = [1, 1, 1, 1]} : vector<2x10x10x4xf32> to vector<2x8x8x4xf32>
    %22 = vector.extract_strided_slice %18 {offsets = [0, 1, 0, 0], sizes = [2, 8, 8, 4], strides = [1, 1, 1, 1]} : vector<2x10x10x4xf32> to vector<2x8x8x4xf32>
    %23 = vector.extract_strided_slice %18 {offsets = [0, 1, 1, 0], sizes = [2, 8, 8, 4], strides = [1, 1, 1, 1]} : vector<2x10x10x4xf32> to vector<2x8x8x4xf32>
    %24 = vector.extract_strided_slice %18 {offsets = [0, 1, 2, 0], sizes = [2, 8, 8, 4], strides = [1, 1, 1, 1]} : vector<2x10x10x4xf32> to vector<2x8x8x4xf32>
    %25 = vector.extract_strided_slice %18 {offsets = [0, 2, 0, 0], sizes = [2, 8, 8, 4], strides = [1, 1, 1, 1]} : vector<2x10x10x4xf32> to vector<2x8x8x4xf32>
    %26 = vector.extract_strided_slice %18 {offsets = [0, 2, 1, 0], sizes = [2, 8, 8, 4], strides = [1, 1, 1, 1]} : vector<2x10x10x4xf32> to vector<2x8x8x4xf32>
    %27 = vector.extract_strided_slice %18 {offsets = [0, 2, 2, 0], sizes = [2, 8, 8, 4], strides = [1, 1, 1, 1]} : vector<2x10x10x4xf32> to vector<2x8x8x4xf32>
    %28 = tpu.concatenate %19, %20, %21, %22, %23, %24, %25, %26, %27 in 3 : vector<2x8x8x4xf32>, vector<2x8x8x4xf32>, vector<2x8x8x4xf32>, vector<2x8x8x4xf32>, vector<2x8x8x4xf32>, vector<2x8x8x4xf32>, vector<2x8x8x4xf32>, vector<2x8x8x4xf32>, vector<2x8x8x4xf32> -> vector<2x8x8x36xf32>
    %29 = vector.shape_cast %28 : vector<2x8x8x36xf32> to vector<128x36xf32>
    %cst = arith.constant dense<0.000000e+00> : vector<128x6xf32>
    %30 = tpu.matmul %29, %9, %cst {dimension_numbers = #tpu.dot_dimension_numbers<[1], [0], [0], [1], [0, 0, 1, 1], [], []>} : vector<128x36xf32>, vector<36x6xf32>, vector<128x6xf32> -> vector<128x6xf32>
    %31 = vector.broadcast %10 : vector<1x6xf32> to vector<128x6xf32>
    %32 = arith.addf %30, %31 : vector<128x6xf32>
    %cst_12 = arith.constant dense<0.000000e+00> : vector<6xf32>
    %33 = vector.multi_reduction <add>, %32, %cst_12 [0] : vector<128x6xf32> to vector<6xf32>
    %34 = vector.shape_cast %33 : vector<6xf32> to vector<1x6xf32>
    %35 = arith.mulf %32, %32 : vector<128x6xf32>
    %cst_13 = arith.constant dense<0.000000e+00> : vector<6xf32>
    %36 = vector.multi_reduction <add>, %35, %cst_13 [0] : vector<128x6xf32> to vector<6xf32>
    %37 = vector.shape_cast %36 : vector<6xf32> to vector<1x6xf32>
    %cst_14 = arith.constant 7.812500e-03 : f32
    %38 = vector.broadcast %cst_14 : f32 to vector<1x6xf32>
    %39 = arith.mulf %34, %38 : vector<1x6xf32>
    %cst_15 = arith.constant 7.812500e-03 : f32
    %40 = vector.broadcast %cst_15 : f32 to vector<1x6xf32>
    %41 = arith.mulf %37, %40 : vector<1x6xf32>
    %42 = arith.mulf %39, %39 : vector<1x6xf32>
    %43 = arith.subf %41, %42 : vector<1x6xf32>
    %44 = vector.broadcast %39 : vector<1x6xf32> to vector<128x6xf32>
    %45 = arith.subf %32, %44 : vector<128x6xf32>
    %cst_16 = arith.constant 9.99999974E-6 : f32
    %46 = vector.broadcast %cst_16 : f32 to vector<1x6xf32>
    %47 = arith.addf %43, %46 : vector<1x6xf32>
    %48 = math.rsqrt %47 : vector<1x6xf32>
    %49 = vector.broadcast %48 : vector<1x6xf32> to vector<128x6xf32>
    %50 = arith.mulf %45, %49 : vector<128x6xf32>
    %51 = vector.broadcast %11 : vector<1x6xf32> to vector<128x6xf32>
    %52 = arith.mulf %50, %51 : vector<128x6xf32>
    %53 = vector.broadcast %12 : vector<1x6xf32> to vector<128x6xf32>
    %54 = arith.addf %52, %53 : vector<128x6xf32>
    %55 = vector.shape_cast %54 : vector<128x6xf32> to vector<2x8x8x6xf32>
    %c0_17 = arith.constant 0 : index
    %c0_18 = arith.constant 0 : index
    %56 = vector.load %arg5[%c0_17, %c0_18] : memref<54x8xf32, #tpu.memory_space<vmem>>, vector<54x8xf32>
    %c0_19 = arith.constant 0 : index
    %c0_20 = arith.constant 0 : index
    %57 = vector.load %arg6[%c0_19, %c0_20] : memref<1x8xf32, #tpu.memory_space<vmem>>, vector<1x8xf32>
    %c0_21 = arith.constant 0 : index
    %c0_22 = arith.constant 0 : index
    %58 = vector.load %arg7[%c0_21, %c0_22] : memref<1x8xf32, #tpu.memory_space<vmem>>, vector<1x8xf32>
    %c0_23 = arith.constant 0 : index
    %c0_24 = arith.constant 0 : index
    %59 = vector.load %arg8[%c0_23, %c0_24] : memref<1x8xf32, #tpu.memory_space<vmem>>, vector<1x8xf32>
    %60 = vector.extract_strided_slice %55 {offsets = [0, 0, 0, 0], sizes = [2, 1, 8, 6], strides = [1, 1, 1, 1]} : vector<2x8x8x6xf32> to vector<2x1x8x6xf32>
    %61 = vector.extract_strided_slice %55 {offsets = [0, 7, 0, 0], sizes = [2, 1, 8, 6], strides = [1, 1, 1, 1]} : vector<2x8x8x6xf32> to vector<2x1x8x6xf32>
    %62 = tpu.concatenate %60, %55, %61 in 1 : vector<2x1x8x6xf32>, vector<2x8x8x6xf32>, vector<2x1x8x6xf32> -> vector<2x10x8x6xf32>
    %63 = vector.extract_strided_slice %62 {offsets = [0, 0, 0, 0], sizes = [2, 10, 1, 6], strides = [1, 1, 1, 1]} : vector<2x10x8x6xf32> to vector<2x10x1x6xf32>
    %64 = vector.extract_strided_slice %62 {offsets = [0, 0, 7, 0], sizes = [2, 10, 1, 6], strides = [1, 1, 1, 1]} : vector<2x10x8x6xf32> to vector<2x10x1x6xf32>
    %65 = tpu.concatenate %63, %62, %64 in 2 : vector<2x10x1x6xf32>, vector<2x10x8x6xf32>, vector<2x10x1x6xf32> -> vector<2x10x10x6xf32>
    %66 = vector.extract_strided_slice %65 {offsets = [0, 0, 0, 0], sizes = [2, 8, 8, 6], strides = [1, 1, 1, 1]} : vector<2x10x10x6xf32> to vector<2x8x8x6xf32>
    %67 = vector.extract_strided_slice %65 {offsets = [0, 0, 1, 0], sizes = [2, 8, 8, 6], strides = [1, 1, 1, 1]} : vector<2x10x10x6xf32> to vector<2x8x8x6xf32>
    %68 = vector.extract_strided_slice %65 {offsets = [0, 0, 2, 0], sizes = [2, 8, 8, 6], strides = [1, 1, 1, 1]} : vector<2x10x10x6xf32> to vector<2x8x8x6xf32>
    %69 = vector.extract_strided_slice %65 {offsets = [0, 1, 0, 0], sizes = [2, 8, 8, 6], strides = [1, 1, 1, 1]} : vector<2x10x10x6xf32> to vector<2x8x8x6xf32>
    %70 = vector.extract_strided_slice %65 {offsets = [0, 1, 1, 0], sizes = [2, 8, 8, 6], strides = [1, 1, 1, 1]} : vector<2x10x10x6xf32> to vector<2x8x8x6xf32>
    %71 = vector.extract_strided_slice %65 {offsets = [0, 1, 2, 0], sizes = [2, 8, 8, 6], strides = [1, 1, 1, 1]} : vector<2x10x10x6xf32> to vector<2x8x8x6xf32>
    %72 = vector.extract_strided_slice %65 {offsets = [0, 2, 0, 0], sizes = [2, 8, 8, 6], strides = [1, 1, 1, 1]} : vector<2x10x10x6xf32> to vector<2x8x8x6xf32>
    %73 = vector.extract_strided_slice %65 {offsets = [0, 2, 1, 0], sizes = [2, 8, 8, 6], strides = [1, 1, 1, 1]} : vector<2x10x10x6xf32> to vector<2x8x8x6xf32>
    %74 = vector.extract_strided_slice %65 {offsets = [0, 2, 2, 0], sizes = [2, 8, 8, 6], strides = [1, 1, 1, 1]} : vector<2x10x10x6xf32> to vector<2x8x8x6xf32>
    %75 = tpu.concatenate %66, %67, %68, %69, %70, %71, %72, %73, %74 in 3 : vector<2x8x8x6xf32>, vector<2x8x8x6xf32>, vector<2x8x8x6xf32>, vector<2x8x8x6xf32>, vector<2x8x8x6xf32>, vector<2x8x8x6xf32>, vector<2x8x8x6xf32>, vector<2x8x8x6xf32>, vector<2x8x8x6xf32> -> vector<2x8x8x54xf32>
    %76 = vector.shape_cast %75 : vector<2x8x8x54xf32> to vector<128x54xf32>
    %cst_25 = arith.constant dense<0.000000e+00> : vector<128x8xf32>
    %77 = tpu.matmul %76, %56, %cst_25 {dimension_numbers = #tpu.dot_dimension_numbers<[1], [0], [0], [1], [0, 0, 1, 1], [], []>} : vector<128x54xf32>, vector<54x8xf32>, vector<128x8xf32> -> vector<128x8xf32>
    %78 = vector.broadcast %57 : vector<1x8xf32> to vector<128x8xf32>
    %79 = arith.addf %77, %78 : vector<128x8xf32>
    %cst_26 = arith.constant dense<0.000000e+00> : vector<8xf32>
    %80 = vector.multi_reduction <add>, %79, %cst_26 [0] : vector<128x8xf32> to vector<8xf32>
    %81 = vector.shape_cast %80 : vector<8xf32> to vector<1x8xf32>
    %82 = arith.mulf %79, %79 : vector<128x8xf32>
    %cst_27 = arith.constant dense<0.000000e+00> : vector<8xf32>
    %83 = vector.multi_reduction <add>, %82, %cst_27 [0] : vector<128x8xf32> to vector<8xf32>
    %84 = vector.shape_cast %83 : vector<8xf32> to vector<1x8xf32>
    %cst_28 = arith.constant 7.812500e-03 : f32
    %85 = vector.broadcast %cst_28 : f32 to vector<1x8xf32>
    %86 = arith.mulf %81, %85 : vector<1x8xf32>
    %cst_29 = arith.constant 7.812500e-03 : f32
    %87 = vector.broadcast %cst_29 : f32 to vector<1x8xf32>
    %88 = arith.mulf %84, %87 : vector<1x8xf32>
    %89 = arith.mulf %86, %86 : vector<1x8xf32>
    %90 = arith.subf %88, %89 : vector<1x8xf32>
    %91 = vector.broadcast %86 : vector<1x8xf32> to vector<128x8xf32>
    %92 = arith.subf %79, %91 : vector<128x8xf32>
    %cst_30 = arith.constant 9.99999974E-6 : f32
    %93 = vector.broadcast %cst_30 : f32 to vector<1x8xf32>
    %94 = arith.addf %90, %93 : vector<1x8xf32>
    %95 = math.rsqrt %94 : vector<1x8xf32>
    %96 = vector.broadcast %95 : vector<1x8xf32> to vector<128x8xf32>
    %97 = arith.mulf %92, %96 : vector<128x8xf32>
    %98 = vector.broadcast %58 : vector<1x8xf32> to vector<128x8xf32>
    %99 = arith.mulf %97, %98 : vector<128x8xf32>
    %100 = vector.broadcast %59 : vector<1x8xf32> to vector<128x8xf32>
    %101 = arith.addf %99, %100 : vector<128x8xf32>
    %102 = arith.negf %101 : vector<128x8xf32>
    %103 = math.exp %102 : vector<128x8xf32>
    %cst_31 = arith.constant 1.000000e+00 : f32
    %104 = vector.broadcast %cst_31 : f32 to vector<128x8xf32>
    %105 = arith.addf %104, %103 : vector<128x8xf32>
    %106 = arith.divf %104, %105 : vector<128x8xf32>
    %c0_32 = arith.constant 0 : index
    %c0_33 = arith.constant 0 : index
    %107 = vector.load %arg9[%c0_32, %c0_33] : memref<128x8xf32, #tpu.memory_space<vmem>>, vector<128x8xf32>
    tpu.vector_store %arg9[%c0_32, %c0_33], %106 {strides = array<i32>} : memref<128x8xf32, #tpu.memory_space<vmem>>, vector<128x8xf32>,
    return
  }
}

</mosaic_0001>

<llo_original>
// kernel: down_forward.1
$region0: #{down_forward.1}
  #allocation0 [shape = 'u32[]', space=smem, size = 0x4, offset = 0x4, fixed_abs, tag = 'smem constant byte address 0x4 - core index']
  #allocation1 [shape = 'u32[144,128]{1,0:T(1,128)}', space=vmem, size = 0x12000, scoped, tag = 'internal scratch']
  %s0 = inlined_call_operand.vmem [shape: f32[2,8,2,8,8], index: 0, kind: input, shape index: {}]
  %s1 = inlined_call_operand.vmem [shape: f32[36,6], index: 1, kind: input, shape index: {}]
  %s2 = inlined_call_operand.vmem [shape: f32[1,6], index: 2, kind: input, shape index: {}]
  %s3 = inlined_call_operand.vmem [shape: f32[1,6], index: 3, kind: input, shape index: {}]
  %s4 = inlined_call_operand.vmem [shape: f32[1,6], index: 4, kind: input, shape index: {}]
  %s5 = inlined_call_operand.vmem [shape: f32[54,8], index: 5, kind: input, shape index: {}]
  %s6 = inlined_call_operand.vmem [shape: f32[1,8], index: 6, kind: input, shape index: {}]
  %s7 = inlined_call_operand.vmem [shape: f32[1,8], index: 7, kind: input, shape index: {}]
  %s8 = inlined_call_operand.vmem [shape: f32[1,8], index: 8, kind: input, shape index: {}]
  %s9 = inlined_call_operand.vmem [shape: f32[128,8], index: 9, kind: output, shape index: {}]
  %s10 = sld [smem:[#allocation0]]
  $region46: #{down_forward.1} parent=0
    _
  %s12 = ssub.s32 1, %s10
  %s13 = scalar_select 0, %s12, %s10
  // Predicated region
  $region2: #{down_forward.1} parent=0 // pred_check
    _
  $region3: #{down_forward.1} parent=0 // pred_check_branch
    %15 = sbr.rel (0) target = $region5
  $region4: #{down_forward.1} parent=0 // pred_region
    _
  $region5: #{down_forward.1} parent=0 // pred_fallthru
    _
  // Predicated region
  $region6: #{down_forward.1} parent=0 // pred_check
    _
  $region7: #{down_forward.1} parent=0 // pred_check_branch
    %17 = sbr.rel (0) target = $region9
  $region8: #{down_forward.1} parent=0 // pred_region
    _
  $region9: #{down_forward.1} parent=0 // pred_fallthru
    _
  // Predicated region
  $region10: #{down_forward.1} parent=0 // pred_check
    _
  $region11: #{down_forward.1} parent=0 // pred_check_branch
    %19 = sbr.rel (0) target = $region13
  $region12: #{down_forward.1} parent=0 // pred_region
    _
  $region13: #{down_forward.1} parent=0 // pred_fallthru
    _
  // Predicated region
  $region14: #{down_forward.1} parent=0 // pred_check
    _
  $region15: #{down_forward.1} parent=0 // pred_check_branch
    %21 = sbr.rel (0) target = $region17
  $region16: #{down_forward.1} parent=0 // pred_region
    _
  $region17: #{down_forward.1} parent=0 // pred_fallthru
    _
  // Predicated region
  $region18: #{down_forward.1} parent=0 // pred_check
    _
  $region19: #{down_forward.1} parent=0 // pred_check_branch
    %23 = sbr.rel (0) target = $region21
  $region20: #{down_forward.1} parent=0 // pred_region
    _
  $region21: #{down_forward.1} parent=0 // pred_fallthru
    _
  // Predicated region
  $region22: #{down_forward.1} parent=0 // pred_check
    _
  $region23: #{down_forward.1} parent=0 // pred_check_branch
    %25 = sbr.rel (0) target = $region25
  $region24: #{down_forward.1} parent=0 // pred_region
    _
  $region25: #{down_forward.1} parent=0 // pred_fallthru
    _
  // Predicated region
  $region26: #{down_forward.1} parent=0 // pred_check
    _
  $region27: #{down_forward.1} parent=0 // pred_check_branch
    %27 = sbr.rel (0) target = $region29
  $region28: #{down_forward.1} parent=0 // pred_region
    _
  $region29: #{down_forward.1} parent=0 // pred_fallthru
    _
  // Predicated region
  $region30: #{down_forward.1} parent=0 // pred_check
    _
  $region31: #{down_forward.1} parent=0 // pred_check_branch
    %29 = sbr.rel (0) target = $region33
  $region32: #{down_forward.1} parent=0 // pred_region
    _
  $region33: #{down_forward.1} parent=0 // pred_fallthru
    _
  // Predicated region
  $region34: #{down_forward.1} parent=0 // pred_check
    _
  $region35: #{down_forward.1} parent=0 // pred_check_branch
    %31 = sbr.rel (0) target = $region37
  $region36: #{down_forward.1} parent=0 // pred_region
    _
  $region37: #{down_forward.1} parent=0 // pred_fallthru
    _
  %v32 = vld [vmem:[%s0] sm:$0xff]
  %v33 = vld [vmem:[%s0 + $0x8] sm:$0xff]
  %v34 = vld [vmem:[%s0 + $0x10] sm:$0xff]
  %v35 = vld [vmem:[%s0 + $0x18] sm:$0xff]
  %v36 = vld [vmem:[%s0 + $0x20] sm:$0xff]
  %v37 = vld [vmem:[%s0 + $0x28] sm:$0xff]
  %v38 = vld [vmem:[%s0 + $0x30] sm:$0xff]
  %v39 = vld [vmem:[%s0 + $0x38] sm:$0xff]
  %v40 = vld [vmem:[%s0 + $0x40] sm:$0xff]
  %v41 = vld [vmem:[%s0 + $0x48] sm:$0xff]
  %v42 = vld [vmem:[%s0 + $0x50] sm:$0xff]
  %v43 = vld [vmem:[%s0 + $0x58] sm:$0xff]
  %v44 = vld [vmem:[%s0 + $0x60] sm:$0xff]
  %v45 = vld [vmem:[%s0 + $0x68] sm:$0xff]
  %v46 = vld [vmem:[%s0 + $0x70] sm:$0xff]
  %v47 = vld [vmem:[%s0 + $0x78] sm:$0xff]
  %v48 = vld [vmem:[%s0 + $0x80] sm:$0xff]
  %v49 = vld [vmem:[%s0 + $0x88] sm:$0xff]
  %v50 = vld [vmem:[%s0 + $0x90] sm:$0xff]
  %v51 = vld [vmem:[%s0 + $0x98] sm:$0xff]
  %v52 = vld [vmem:[%s0 + $0xa0] sm:$0xff]
  %v53 = vld [vmem:[%s0 + $0xa8] sm:$0xff]
  %v54 = vld [vmem:[%s0 + $0xb0] sm:$0xff]
  %v55 = vld [vmem:[%s0 + $0xb8] sm:$0xff]
  %v56 = vld [vmem:[%s0 + $0xc0] sm:$0xff]
  %v57 = vld [vmem:[%s0 + $0xc8] sm:$0xff]
  %v58 = vld [vmem:[%s0 + $0xd0] sm:$0xff]
  %v59 = vld [vmem:[%s0 + $0xd8] sm:$0xff]
  %v60 = vld [vmem:[%s0 + $0xe0] sm:$0xff]
  %v61 = vld [vmem:[%s0 + $0xe8] sm:$0xff]
  %v62 = vld [vmem:[%s0 + $0xf0] sm:$0xff]
  %v63 = vld [vmem:[%s0 + $0xf8] sm:$0xff]
  %v64 = vmax.f32 %v32, %v33
  %v65 = vmax.f32 %v34, %v35
  %v66 = vmax.f32 %v36, %v37
  %v67 = vmax.f32 %v38, %v39
  %v68 = vmax.f32 %v40, %v41
  %v69 = vmax.f32 %v42, %v43
  %v70 = vmax.f32 %v44, %v45
  %v71 = vmax.f32 %v46, %v47
  %v72 = vmax.f32 %v48, %v49
  %v73 = vmax.f32 %v50, %v51
  %v74 = vmax.f32 %v52, %v53
  %v75 = vmax.f32 %v54, %v55
  %v76 = vmax.f32 %v56, %v57
  %v77 = vmax.f32 %v58, %v59
  %v78 = vmax.f32 %v60, %v61
  %v79 = vmax.f32 %v62, %v63
  %96 = vrot.lane.b32.xlu0 %v64, 124
  %v97 = vpop.permute.xlu0 %96
  %98 = vrot.lane.b32.xlu0 %v65, 124
  %v99 = vpop.permute.xlu0 %98
  %100 = vrot.lane.b32.xlu0 %v66, 124
  %v101 = vpop.permute.xlu0 %100
  %102 = vrot.lane.b32.xlu0 %v67, 124
  %v103 = vpop.permute.xlu0 %102
  %104 = vrot.lane.b32.xlu0 %v68, 124
  %v105 = vpop.permute.xlu0 %104
  %106 = vrot.lane.b32.xlu0 %v69, 124
  %v107 = vpop.permute.xlu0 %106
  %108 = vrot.lane.b32.xlu0 %v70, 124
  %v109 = vpop.permute.xlu0 %108
  %110 = vrot.lane.b32.xlu0 %v71, 124
  %v111 = vpop.permute.xlu0 %110
  %112 = vrot.lane.b32.xlu0 %v72, 124
  %v113 = vpop.permute.xlu0 %112
  %114 = vrot.lane.b32.xlu0 %v73, 124
  %v115 = vpop.permute.xlu0 %114
  %116 = vrot.lane.b32.xlu0 %v74, 124
  %v117 = vpop.permute.xlu0 %116
  %118 = vrot.lane.b32.xlu0 %v75, 124
  %v119 = vpop.permute.xlu0 %118
  %120 = vrot.lane.b32.xlu0 %v76, 124
  %v121 = vpop.permute.xlu0 %120
  %122 = vrot.lane.b32.xlu0 %v77, 124
  %v123 = vpop.permute.xlu0 %122
  %124 = vrot.lane.b32.xlu0 %v78, 124
  %v125 = vpop.permute.xlu0 %124
  %126 = vrot.lane.b32.xlu0 %v79, 124
  %v127 = vpop.permute.xlu0 %126
  %v144 = vmax.f32 %v64, %v97
  %v145 = vmax.f32 %v65, %v99
  %v146 = vmax.f32 %v66, %v101
  %v147 = vmax.f32 %v67, %v103
  %v148 = vmax.f32 %v68, %v105
  %v149 = vmax.f32 %v69, %v107
  %v150 = vmax.f32 %v70, %v109
  %v151 = vmax.f32 %v71, %v111
  %v152 = vmax.f32 %v72, %v113
  %v153 = vmax.f32 %v73, %v115
  %v154 = vmax.f32 %v74, %v117
  %v155 = vmax.f32 %v75, %v119
  %v156 = vmax.f32 %v76, %v121
  %v157 = vmax.f32 %v77, %v123
  %v158 = vmax.f32 %v78, %v125
  %v159 = vmax.f32 %v79, %v127
  %v160 = vld [vmem:[%s1] sm:$0xff]
  %v161 = vld [vmem:[%s1 + $0x8] sm:$0xff]
  %v162 = vld [vmem:[%s1 + $0x10] sm:$0xff]
  %v163 = vld [vmem:[%s1 + $0x18] sm:$0xff]
  %v164 = vld [vmem:[%s1 + $0x20] sm:$0xf]
  %v165 = vld [vmem:[%s2] sm:$0x1]
  %v166 = vld [vmem:[%s3] sm:$0x1]
  %v167 = vld [vmem:[%s4] sm:$0x1]
  %v184 = vrot.slane %v144, 7
  %v185 = vrot.slane %v145, 7
  %v186 = vrot.slane %v146, 7
  %v187 = vrot.slane %v147, 7
  %v188 = vrot.slane %v148, 7
  %v189 = vrot.slane %v149, 7
  %v190 = vrot.slane %v150, 7
  %v191 = vrot.slane %v151, 7
  %v192 = vrot.slane %v152, 7
  %v193 = vrot.slane %v153, 7
  %v194 = vrot.slane %v154, 7
  %v195 = vrot.slane %v155, 7
  %v196 = vrot.slane %v156, 7
  %v197 = vrot.slane %v157, 7
  %v198 = vrot.slane %v158, 7
  %v199 = vrot.slane %v159, 7
  %v216 = vrot.slane %v144, 6
  %v217 = vrot.slane %v145, 6
  %v218 = vrot.slane %v146, 6
  %v219 = vrot.slane %v147, 6
  %v220 = vrot.slane %v148, 6
  %v221 = vrot.slane %v149, 6
  %v222 = vrot.slane %v150, 6
  %v223 = vrot.slane %v151, 6
  %v224 = vrot.slane %v152, 6
  %v225 = vrot.slane %v153, 6
  %v226 = vrot.slane %v154, 6
  %v227 = vrot.slane %v155, 6
  %v228 = vrot.slane %v156, 6
  %v229 = vrot.slane %v157, 6
  %v230 = vrot.slane %v158, 6
  %v231 = vrot.slane %v159, 6
  %vm248 = vcmask 1040384
  %v249 = vsel %vm248, %v144, %v184
  %v250 = vsel %vm248, %v145, %v185
  %v251 = vsel %vm248, %v146, %v186
  %v252 = vsel %vm248, %v147, %v187
  %v253 = vsel %vm248, %v148, %v188
  %v254 = vsel %vm248, %v149, %v189
  %v255 = vsel %vm248, %v150, %v190
  %v256 = vsel %vm248, %v151, %v191
  %v257 = vsel %vm248, %v152, %v192
  %v258 = vsel %vm248, %v153, %v193
  %v259 = vsel %vm248, %v154, %v194
  %v260 = vsel %vm248, %v155, %v195
  %v261 = vsel %vm248, %v156, %v196
  %v262 = vsel %vm248, %v157, %v197
  %v263 = vsel %vm248, %v158, %v198
  %v264 = vsel %vm248, %v159, %v199
  %v265 = vsel %vm248, %v184, %v216
  %v266 = vsel %vm248, %v185, %v217
  %v267 = vsel %vm248, %v186, %v218
  %v268 = vsel %vm248, %v187, %v219
  %v269 = vsel %vm248, %v188, %v220
  %v270 = vsel %vm248, %v189, %v221
  %v271 = vsel %vm248, %v190, %v222
  %v272 = vsel %vm248, %v191, %v223
  %v273 = vsel %vm248, %v192, %v224
  %v274 = vsel %vm248, %v193, %v225
  %v275 = vsel %vm248, %v194, %v226
  %v276 = vsel %vm248, %v195, %v227
  %v277 = vsel %vm248, %v196, %v228
  %v278 = vsel %vm248, %v197, %v229
  %v279 = vsel %vm248, %v198, %v230
  %v280 = vsel %vm248, %v199, %v231
  %vm309 = vcmask 1046528
  %v310 = vrot.slane %v249, 1
  %v311 = vrot.slane %v265, 1
  %v312 = vsel %vm309, %v310, %v311
  %v313 = vrot.slane %v250, 1
  %v314 = vrot.slane %v266, 1
  %v315 = vsel %vm309, %v313, %v314
  %v316 = vrot.slane %v251, 1
  %v317 = vrot.slane %v267, 1
  %v318 = vsel %vm309, %v316, %v317
  %v319 = vrot.slane %v252, 1
  %v320 = vrot.slane %v268, 1
  %v321 = vsel %vm309, %v319, %v320
  %v322 = vrot.slane %v253, 1
  %v323 = vrot.slane %v269, 1
  %v324 = vsel %vm309, %v322, %v323
  %v325 = vrot.slane %v254, 1
  %v326 = vrot.slane %v270, 1
  %v327 = vsel %vm309, %v325, %v326
  %v328 = vrot.slane %v255, 1
  %v329 = vrot.slane %v271, 1
  %v330 = vsel %vm309, %v328, %v329
  %v331 = vrot.slane %v257, 1
  %v332 = vrot.slane %v273, 1
  %v333 = vsel %vm309, %v331, %v332
  %v334 = vrot.slane %v258, 1
  %v335 = vrot.slane %v274, 1
  %v336 = vsel %vm309, %v334, %v335
  %v337 = vrot.slane %v259, 1
  %v338 = vrot.slane %v275, 1
  %v339 = vsel %vm309, %v337, %v338
  %v340 = vrot.slane %v260, 1
  %v341 = vrot.slane %v276, 1
  %v342 = vsel %vm309, %v340, %v341
  %v343 = vrot.slane %v261, 1
  %v344 = vrot.slane %v277, 1
  %v345 = vsel %vm309, %v343, %v344
  %v346 = vrot.slane %v262, 1
  %v347 = vrot.slane %v278, 1
  %v348 = vsel %vm309, %v346, %v347
  %v349 = vrot.slane %v263, 1
  %v350 = vrot.slane %v279, 1
  %v351 = vsel %vm309, %v349, %v350
  %352 = vrot.lane.b32.xlu0 %v312, 4
  %v353 = vpop.permute.xlu0 %352
  %354 = vrot.lane.b32.xlu0 %v315, 4
  %v355 = vpop.permute.xlu0 %354
  %356 = vrot.lane.b32.xlu0 %v318, 4
  %v357 = vpop.permute.xlu0 %356
  %358 = vrot.lane.b32.xlu0 %v321, 4
  %v359 = vpop.permute.xlu0 %358
  %360 = vrot.lane.b32.xlu0 %v324, 4
  %v361 = vpop.permute.xlu0 %360
  %362 = vrot.lane.b32.xlu0 %v327, 4
  %v363 = vpop.permute.xlu0 %362
  %364 = vrot.lane.b32.xlu0 %v330, 4
  %v365 = vpop.permute.xlu0 %364
  %366 = vrot.lane.b32.xlu0 %v333, 4
  %v367 = vpop.permute.xlu0 %366
  %368 = vrot.lane.b32.xlu0 %v336, 4
  %v369 = vpop.permute.xlu0 %368
  %370 = vrot.lane.b32.xlu0 %v339, 4
  %v371 = vpop.permute.xlu0 %370
  %372 = vrot.lane.b32.xlu0 %v342, 4
  %v373 = vpop.permute.xlu0 %372
  %374 = vrot.lane.b32.xlu0 %v345, 4
  %v375 = vpop.permute.xlu0 %374
  %376 = vrot.lane.b32.xlu0 %v348, 4
  %v377 = vpop.permute.xlu0 %376
  %378 = vrot.lane.b32.xlu0 %v351, 4
  %v379 = vpop.permute.xlu0 %378
  %vm394 = vcmask 1045504
  %v395 = vrot.slane %v249, 2
  %v396 = vrot.slane %v265, 2
  %v397 = vsel %vm394, %v395, %v396
  %v398 = vrot.slane %v250, 2
  %v399 = vrot.slane %v266, 2
  %v400 = vsel %vm394, %v398, %v399
  %v401 = vrot.slane %v251, 2
  %v402 = vrot.slane %v267, 2
  %v403 = vsel %vm394, %v401, %v402
  %v404 = vrot.slane %v252, 2
  %v405 = vrot.slane %v268, 2
  %v406 = vsel %vm394, %v404, %v405
  %v407 = vrot.slane %v253, 2
  %v408 = vrot.slane %v269, 2
  %v409 = vsel %vm394, %v407, %v408
  %v410 = vrot.slane %v254, 2
  %v411 = vrot.slane %v270, 2
  %v412 = vsel %vm394, %v410, %v411
  %v413 = vrot.slane %v255, 2
  %v414 = vrot.slane %v271, 2
  %v415 = vsel %vm394, %v413, %v414
  %v416 = vrot.slane %v257, 2
  %v417 = vrot.slane %v273, 2
  %v418 = vsel %vm394, %v416, %v417
  %v419 = vrot.slane %v258, 2
  %v420 = vrot.slane %v274, 2
  %v421 = vsel %vm394, %v419, %v420
  %v422 = vrot.slane %v259, 2
  %v423 = vrot.slane %v275, 2
  %v424 = vsel %vm394, %v422, %v423
  %v425 = vrot.slane %v260, 2
  %v426 = vrot.slane %v276, 2
  %v427 = vsel %vm394, %v425, %v426
  %v428 = vrot.slane %v261, 2
  %v429 = vrot.slane %v277, 2
  %v430 = vsel %vm394, %v428, %v429
  %v431 = vrot.slane %v262, 2
  %v432 = vrot.slane %v278, 2
  %v433 = vsel %vm394, %v431, %v432
  %v434 = vrot.slane %v263, 2
  %v435 = vrot.slane %v279, 2
  %v436 = vsel %vm394, %v434, %v435
  %437 = vrot.lane.b32.xlu0 %v397, 8
  %v438 = vpop.permute.xlu0 %437
  %439 = vrot.lane.b32.xlu0 %v400, 8
  %v440 = vpop.permute.xlu0 %439
  %441 = vrot.lane.b32.xlu0 %v403, 8
  %v442 = vpop.permute.xlu0 %441
  %443 = vrot.lane.b32.xlu0 %v406, 8
  %v444 = vpop.permute.xlu0 %443
  %445 = vrot.lane.b32.xlu0 %v409, 8
  %v446 = vpop.permute.xlu0 %445
  %447 = vrot.lane.b32.xlu0 %v412, 8
  %v448 = vpop.permute.xlu0 %447
  %449 = vrot.lane.b32.xlu0 %v415, 8
  %v450 = vpop.permute.xlu0 %449
  %451 = vrot.lane.b32.xlu0 %v418, 8
  %v452 = vpop.permute.xlu0 %451
  %453 = vrot.lane.b32.xlu0 %v421, 8
  %v454 = vpop.permute.xlu0 %453
  %455 = vrot.lane.b32.xlu0 %v424, 8
  %v456 = vpop.permute.xlu0 %455
  %457 = vrot.lane.b32.xlu0 %v427, 8
  %v458 = vpop.permute.xlu0 %457
  %459 = vrot.lane.b32.xlu0 %v430, 8
  %v460 = vpop.permute.xlu0 %459
  %461 = vrot.lane.b32.xlu0 %v433, 8
  %v462 = vpop.permute.xlu0 %461
  %463 = vrot.lane.b32.xlu0 %v436, 8
  %v464 = vpop.permute.xlu0 %463
  %481 = vrot.lane.b32.xlu0 %v249, 12
  %v482 = vpop.permute.xlu0 %481
  %483 = vrot.lane.b32.xlu0 %v250, 12
  %v484 = vpop.permute.xlu0 %483
  %485 = vrot.lane.b32.xlu0 %v251, 12
  %v486 = vpop.permute.xlu0 %485
  %487 = vrot.lane.b32.xlu0 %v252, 12
  %v488 = vpop.permute.xlu0 %487
  %489 = vrot.lane.b32.xlu0 %v253, 12
  %v490 = vpop.permute.xlu0 %489
  %491 = vrot.lane.b32.xlu0 %v254, 12
  %v492 = vpop.permute.xlu0 %491
  %493 = vrot.lane.b32.xlu0 %v255, 12
  %v494 = vpop.permute.xlu0 %493
  %495 = vrot.lane.b32.xlu0 %v256, 12
  %v496 = vpop.permute.xlu0 %495
  %497 = vrot.lane.b32.xlu0 %v257, 12
  %v498 = vpop.permute.xlu0 %497
  %499 = vrot.lane.b32.xlu0 %v258, 12
  %v500 = vpop.permute.xlu0 %499
  %501 = vrot.lane.b32.xlu0 %v259, 12
  %v502 = vpop.permute.xlu0 %501
  %503 = vrot.lane.b32.xlu0 %v260, 12
  %v504 = vpop.permute.xlu0 %503
  %505 = vrot.lane.b32.xlu0 %v261, 12
  %v506 = vpop.permute.xlu0 %505
  %507 = vrot.lane.b32.xlu0 %v262, 12
  %v508 = vpop.permute.xlu0 %507
  %509 = vrot.lane.b32.xlu0 %v263, 12
  %v510 = vpop.permute.xlu0 %509
  %511 = vrot.lane.b32.xlu0 %v264, 12
  %v512 = vpop.permute.xlu0 %511
  %v531 = vrot.slane %v256, 1
  %v532 = vrot.slane %v272, 1
  %v533 = vsel %vm309, %v531, %v532
  %v534 = vrot.slane %v264, 1
  %v535 = vrot.slane %v280, 1
  %v536 = vsel %vm309, %v534, %v535
  %537 = vrot.lane.b32.xlu0 %v312, 16
  %v538 = vpop.permute.xlu0 %537
  %539 = vrot.lane.b32.xlu0 %v315, 16
  %v540 = vpop.permute.xlu0 %539
  %541 = vrot.lane.b32.xlu0 %v318, 16
  %v542 = vpop.permute.xlu0 %541
  %543 = vrot.lane.b32.xlu0 %v321, 16
  %v544 = vpop.permute.xlu0 %543
  %545 = vrot.lane.b32.xlu0 %v324, 16
  %v546 = vpop.permute.xlu0 %545
  %547 = vrot.lane.b32.xlu0 %v327, 16
  %v548 = vpop.permute.xlu0 %547
  %549 = vrot.lane.b32.xlu0 %v330, 16
  %v550 = vpop.permute.xlu0 %549
  %551 = vrot.lane.b32.xlu0 %v533, 16
  %v552 = vpop.permute.xlu0 %551
  %553 = vrot.lane.b32.xlu0 %v333, 16
  %v554 = vpop.permute.xlu0 %553
  %555 = vrot.lane.b32.xlu0 %v336, 16
  %v556 = vpop.permute.xlu0 %555
  %557 = vrot.lane.b32.xlu0 %v339, 16
  %v558 = vpop.permute.xlu0 %557
  %559 = vrot.lane.b32.xlu0 %v342, 16
  %v560 = vpop.permute.xlu0 %559
  %561 = vrot.lane.b32.xlu0 %v345, 16
  %v562 = vpop.permute.xlu0 %561
  %563 = vrot.lane.b32.xlu0 %v348, 16
  %v564 = vpop.permute.xlu0 %563
  %565 = vrot.lane.b32.xlu0 %v351, 16
  %v566 = vpop.permute.xlu0 %565
  %567 = vrot.lane.b32.xlu0 %v536, 16
  %v568 = vpop.permute.xlu0 %567
  %v585 = vrot.slane %v256, 2
  %v586 = vrot.slane %v272, 2
  %v587 = vsel %vm394, %v585, %v586
  %v588 = vrot.slane %v264, 2
  %v589 = vrot.slane %v280, 2
  %v590 = vsel %vm394, %v588, %v589
  %591 = vrot.lane.b32.xlu0 %v397, 20
  %v592 = vpop.permute.xlu0 %591
  %593 = vrot.lane.b32.xlu0 %v400, 20
  %v594 = vpop.permute.xlu0 %593
  %595 = vrot.lane.b32.xlu0 %v403, 20
  %v596 = vpop.permute.xlu0 %595
  %597 = vrot.lane.b32.xlu0 %v406, 20
  %v598 = vpop.permute.xlu0 %597
  %599 = vrot.lane.b32.xlu0 %v409, 20
  %v600 = vpop.permute.xlu0 %599
  %601 = vrot.lane.b32.xlu0 %v412, 20
  %v602 = vpop.permute.xlu0 %601
  %603 = vrot.lane.b32.xlu0 %v415, 20
  %v604 = vpop.permute.xlu0 %603
  %605 = vrot.lane.b32.xlu0 %v587, 20
  %v606 = vpop.permute.xlu0 %605
  %607 = vrot.lane.b32.xlu0 %v418, 20
  %v608 = vpop.permute.xlu0 %607
  %609 = vrot.lane.b32.xlu0 %v421, 20
  %v610 = vpop.permute.xlu0 %609
  %611 = vrot.lane.b32.xlu0 %v424, 20
  %v612 = vpop.permute.xlu0 %611
  %613 = vrot.lane.b32.xlu0 %v427, 20
  %v614 = vpop.permute.xlu0 %613
  %615 = vrot.lane.b32.xlu0 %v430, 20
  %v616 = vpop.permute.xlu0 %615
  %617 = vrot.lane.b32.xlu0 %v433, 20
  %v618 = vpop.permute.xlu0 %617
  %619 = vrot.lane.b32.xlu0 %v436, 20
  %v620 = vpop.permute.xlu0 %619
  %621 = vrot.lane.b32.xlu0 %v590, 20
  %v622 = vpop.permute.xlu0 %621
  %639 = vrot.lane.b32.xlu0 %v250, 24
  %v640 = vpop.permute.xlu0 %639
  %641 = vrot.lane.b32.xlu0 %v251, 24
  %v642 = vpop.permute.xlu0 %641
  %643 = vrot.lane.b32.xlu0 %v252, 24
  %v644 = vpop.permute.xlu0 %643
  %645 = vrot.lane.b32.xlu0 %v253, 24
  %v646 = vpop.permute.xlu0 %645
  %647 = vrot.lane.b32.xlu0 %v254, 24
  %v648 = vpop.permute.xlu0 %647
  %649 = vrot.lane.b32.xlu0 %v255, 24
  %v650 = vpop.permute.xlu0 %649
  %651 = vrot.lane.b32.xlu0 %v256, 24
  %v652 = vpop.permute.xlu0 %651
  %653 = vrot.lane.b32.xlu0 %v258, 24
  %v654 = vpop.permute.xlu0 %653
  %655 = vrot.lane.b32.xlu0 %v259, 24
  %v656 = vpop.permute.xlu0 %655
  %657 = vrot.lane.b32.xlu0 %v260, 24
  %v658 = vpop.permute.xlu0 %657
  %659 = vrot.lane.b32.xlu0 %v261, 24
  %v660 = vpop.permute.xlu0 %659
  %661 = vrot.lane.b32.xlu0 %v262, 24
  %v662 = vpop.permute.xlu0 %661
  %663 = vrot.lane.b32.xlu0 %v263, 24
  %v664 = vpop.permute.xlu0 %663
  %665 = vrot.lane.b32.xlu0 %v264, 24
  %v666 = vpop.permute.xlu0 %665
  %681 = vrot.lane.b32.xlu0 %v315, 28
  %v682 = vpop.permute.xlu0 %681
  %683 = vrot.lane.b32.xlu0 %v318, 28
  %v684 = vpop.permute.xlu0 %683
  %685 = vrot.lane.b32.xlu0 %v321, 28
  %v686 = vpop.permute.xlu0 %685
  %687 = vrot.lane.b32.xlu0 %v324, 28
  %v688 = vpop.permute.xlu0 %687
  %689 = vrot.lane.b32.xlu0 %v327, 28
  %v690 = vpop.permute.xlu0 %689
  %691 = vrot.lane.b32.xlu0 %v330, 28
  %v692 = vpop.permute.xlu0 %691
  %693 = vrot.lane.b32.xlu0 %v533, 28
  %v694 = vpop.permute.xlu0 %693
  %695 = vrot.lane.b32.xlu0 %v336, 28
  %v696 = vpop.permute.xlu0 %695
  %697 = vrot.lane.b32.xlu0 %v339, 28
  %v698 = vpop.permute.xlu0 %697
  %699 = vrot.lane.b32.xlu0 %v342, 28
  %v700 = vpop.permute.xlu0 %699
  %701 = vrot.lane.b32.xlu0 %v345, 28
  %v702 = vpop.permute.xlu0 %701
  %703 = vrot.lane.b32.xlu0 %v348, 28
  %v704 = vpop.permute.xlu0 %703
  %705 = vrot.lane.b32.xlu0 %v351, 28
  %v706 = vpop.permute.xlu0 %705
  %707 = vrot.lane.b32.xlu0 %v536, 28
  %v708 = vpop.permute.xlu0 %707
  %723 = vrot.lane.b32.xlu0 %v400, 32
  %v724 = vpop.permute.xlu0 %723
  %725 = vrot.lane.b32.xlu0 %v403, 32
  %v726 = vpop.permute.xlu0 %725
  %727 = vrot.lane.b32.xlu0 %v406, 32
  %v728 = vpop.permute.xlu0 %727
  %729 = vrot.lane.b32.xlu0 %v409, 32
  %v730 = vpop.permute.xlu0 %729
  %731 = vrot.lane.b32.xlu0 %v412, 32
  %v732 = vpop.permute.xlu0 %731
  %733 = vrot.lane.b32.xlu0 %v415, 32
  %v734 = vpop.permute.xlu0 %733
  %735 = vrot.lane.b32.xlu0 %v587, 32
  %v736 = vpop.permute.xlu0 %735
  %737 = vrot.lane.b32.xlu0 %v421, 32
  %v738 = vpop.permute.xlu0 %737
  %739 = vrot.lane.b32.xlu0 %v424, 32
  %v740 = vpop.permute.xlu0 %739
  %741 = vrot.lane.b32.xlu0 %v427, 32
  %v742 = vpop.permute.xlu0 %741
  %743 = vrot.lane.b32.xlu0 %v430, 32
  %v744 = vpop.permute.xlu0 %743
  %745 = vrot.lane.b32.xlu0 %v433, 32
  %v746 = vpop.permute.xlu0 %745
  %747 = vrot.lane.b32.xlu0 %v436, 32
  %v748 = vpop.permute.xlu0 %747
  %749 = vrot.lane.b32.xlu0 %v590, 32
  %v750 = vpop.permute.xlu0 %749
  %vm765 = vcmask 31744
  %v766 = vsel %vm765, %v249, %v353
  %v767 = vsel %vm765, %v250, %v355
  %v768 = vsel %vm765, %v251, %v357
  %v769 = vsel %vm765, %v252, %v359
  %v770 = vsel %vm765, %v253, %v361
  %v771 = vsel %vm765, %v254, %v363
  %v772 = vsel %vm765, %v255, %v365
  %v773 = vsel %vm765, %v257, %v367
  %v774 = vsel %vm765, %v258, %v369
  %v775 = vsel %vm765, %v259, %v371
  %v776 = vsel %vm765, %v260, %v373
  %v777 = vsel %vm765, %v261, %v375
  %v778 = vsel %vm765, %v262, %v377
  %v779 = vsel %vm765, %v263, %v379
  %vm780 = vcmask 64512
  %v781 = vsel %vm780, %v766, %v438
  %v782 = vsel %vm780, %v767, %v440
  %v783 = vsel %vm780, %v768, %v442
  %v784 = vsel %vm780, %v769, %v444
  %v785 = vsel %vm780, %v770, %v446
  %v786 = vsel %vm780, %v771, %v448
  %v787 = vsel %vm780, %v772, %v450
  %v788 = vsel %vm780, %v773, %v452
  %v789 = vsel %vm780, %v774, %v454
  %v790 = vsel %vm780, %v775, %v456
  %v791 = vsel %vm780, %v776, %v458
  %v792 = vsel %vm780, %v777, %v460
  %v793 = vsel %vm780, %v778, %v462
  %v794 = vsel %vm780, %v779, %v464
  %vm795 = vcmask 97280
  %v796 = vsel %vm795, %v781, %v482
  %v797 = vsel %vm795, %v781, %v484
  %v798 = vsel %vm795, %v782, %v486
  %v799 = vsel %vm795, %v783, %v488
  %v800 = vsel %vm795, %v784, %v490
  %v801 = vsel %vm795, %v785, %v492
  %v802 = vsel %vm795, %v786, %v494
  %v803 = vsel %vm795, %v787, %v496
  %v804 = vsel %vm795, %v788, %v498
  %v805 = vsel %vm795, %v788, %v500
  %v806 = vsel %vm795, %v789, %v502
  %v807 = vsel %vm795, %v790, %v504
  %v808 = vsel %vm795, %v791, %v506
  %v809 = vsel %vm795, %v792, %v508
  %v810 = vsel %vm795, %v793, %v510
  %v811 = vsel %vm795, %v794, %v512
  %vm812 = vcmask 130048
  %v813 = vsel %vm812, %v796, %v538
  %v814 = vsel %vm812, %v797, %v540
  %v815 = vsel %vm812, %v798, %v542
  %v816 = vsel %vm812, %v799, %v544
  %v817 = vsel %vm812, %v800, %v546
  %v818 = vsel %vm812, %v801, %v548
  %v819 = vsel %vm812, %v802, %v550
  %v820 = vsel %vm812, %v803, %v552
  %v821 = vsel %vm812, %v804, %v554
  %v822 = vsel %vm812, %v805, %v556
  %v823 = vsel %vm812, %v806, %v558
  %v824 = vsel %vm812, %v807, %v560
  %v825 = vsel %vm812, %v808, %v562
  %v826 = vsel %vm812, %v809, %v564
  %v827 = vsel %vm812, %v810, %v566
  %v828 = vsel %vm812, %v811, %v568
  %vm829 = vcmask 162816
  %v830 = vsel %vm829, %v813, %v592
  %v831 = vsel %vm829, %v814, %v594
  %v832 = vsel %vm829, %v815, %v596
  %v833 = vsel %vm829, %v816, %v598
  %v834 = vsel %vm829, %v817, %v600
  %v835 = vsel %vm829, %v818, %v602
  %v836 = vsel %vm829, %v819, %v604
  %v837 = vsel %vm829, %v820, %v606
  %v838 = vsel %vm829, %v821, %v608
  %v839 = vsel %vm829, %v822, %v610
  %v840 = vsel %vm829, %v823, %v612
  %v841 = vsel %vm829, %v824, %v614
  %v842 = vsel %vm829, %v825, %v616
  %v843 = vsel %vm829, %v826, %v618
  %v844 = vsel %vm829, %v827, %v620
  %v845 = vsel %vm829, %v828, %v622
  %vm846 = vcmask 195584
  %v847 = vsel %vm846, %v830, %v640
  %v848 = vsel %vm846, %v831, %v642
  %v849 = vsel %vm846, %v832, %v644
  %v850 = vsel %vm846, %v833, %v646
  %v851 = vsel %vm846, %v834, %v648
  %v852 = vsel %vm846, %v835, %v650
  %v853 = vsel %vm846, %v836, %v652
  %v854 = vsel %vm846, %v837, %v652
  %v855 = vsel %vm846, %v838, %v654
  %v856 = vsel %vm846, %v839, %v656
  %v857 = vsel %vm846, %v840, %v658
  %v858 = vsel %vm846, %v841, %v660
  %v859 = vsel %vm846, %v842, %v662
  %v860 = vsel %vm846, %v843, %v664
  %v861 = vsel %vm846, %v844, %v666
  %v862 = vsel %vm846, %v845, %v666
  %vm863 = vcmask 228352
  %v864 = vsel %vm863, %v847, %v682
  %v865 = vsel %vm863, %v848, %v684
  %v866 = vsel %vm863, %v849, %v686
  %v867 = vsel %vm863, %v850, %v688
  %v868 = vsel %vm863, %v851, %v690
  %v869 = vsel %vm863, %v852, %v692
  %v870 = vsel %vm863, %v853, %v694
  %v871 = vsel %vm863, %v854, %v694
  %v872 = vsel %vm863, %v855, %v696
  %v873 = vsel %vm863, %v856, %v698
  %v874 = vsel %vm863, %v857, %v700
  %v875 = vsel %vm863, %v858, %v702
  %v876 = vsel %vm863, %v859, %v704
  %v877 = vsel %vm863, %v860, %v706
  %v878 = vsel %vm863, %v861, %v708
  %v879 = vsel %vm863, %v862, %v708
  %vm880 = vcmask 261120
  %v881 = vsel %vm880, %v864, %v724
  %v882 = vsel %vm880, %v865, %v726
  %v883 = vsel %vm880, %v866, %v728
  %v884 = vsel %vm880, %v867, %v730
  %v885 = vsel %vm880, %v868, %v732
  %v886 = vsel %vm880, %v869, %v734
  %v887 = vsel %vm880, %v870, %v736
  %v888 = vsel %vm880, %v871, %v736
  %v889 = vsel %vm880, %v872, %v738
  %v890 = vsel %vm880, %v873, %v740
  %v891 = vsel %vm880, %v874, %v742
  %v892 = vsel %vm880, %v875, %v744
  %v893 = vsel %vm880, %v876, %v746
  %v894 = vsel %vm880, %v877, %v748
  %v895 = vsel %vm880, %v878, %v750
  %v896 = vsel %vm880, %v879, %v750
  %v898 = vlaneseq
  %v899 = vshrl.u32 %v898, 7
  %v900 = vsub.s32 0, %v899
  %v901 = vrot.slane %v165, %v900
  %vm903 = vcmask 293888
  %v905 = vsel %vm903, %v881, 0
  %v908 = vsel %vm903, %v882, 0
  %v911 = vsel %vm903, %v883, 0
  %v914 = vsel %vm903, %v884, 0
  %v917 = vsel %vm903, %v885, 0
  %v920 = vsel %vm903, %v886, 0
  %v923 = vsel %vm903, %v887, 0
  %v926 = vsel %vm903, %v888, 0
  %v929 = vsel %vm903, %v889, 0
  %v932 = vsel %vm903, %v890, 0
  %v935 = vsel %vm903, %v891, 0
  %v938 = vsel %vm903, %v892, 0
  %v941 = vsel %vm903, %v893, 0
  %v944 = vsel %vm903, %v894, 0
  %v947 = vsel %vm903, %v895, 0
  %v950 = vsel %vm903, %v896, 0
  %vm952 = vcmask 1043456
  %v954 = vsel %vm952, %v164, 0
  %956 = vmatprep.subr.mxu0 0.0
  %957 = vmatpush1.msra.mxu0 %v160
  %958 = vmatprep.subr.mxu0 0.0
  %959 = vmatpush1.msra.mxu0 %v161
  %960 = vmatprep.subr.mxu0 0.0
  %961 = vmatpush1.msra.mxu0 %v162
  %962 = vmatprep.subr.mxu0 0.0
  %963 = vmatpush1.msra.mxu0 %v163
  %964 = vmatprep.subr.mxu0 0.0
  %965 = vmatpush1.msra.mxu0 %v954
  %966 = vmatprep.subr.mxu0 0.0
  %967 = vmatpush1.msra.mxu0 0.0
  %968 = vmatprep.subr.mxu0 0.0
  %969 = vmatpush1.msra.mxu0 0.0
  %970 = vmatprep.subr.mxu0 0.0
  %971 = vmatpush1.msra.mxu0 0.0
  %972 = vmatprep.subr.mxu0 0.0
  %973 = vmatpush1.msra.mxu0 0.0
  %974 = vmatprep.subr.mxu0 0.0
  %975 = vmatpush1.msra.mxu0 0.0
  %976 = vmatprep.subr.mxu0 0.0
  %977 = vmatpush1.msra.mxu0 0.0
  %978 = vmatprep.subr.mxu0 0.0
  %979 = vmatpush1.msra.mxu0 0.0
  %980 = vmatprep.subr.mxu0 0.0
  %981 = vmatpush1.msra.mxu0 0.0
  %982 = vmatprep.subr.mxu0 0.0
  %983 = vmatpush1.msra.mxu0 0.0
  %984 = vmatprep.subr.mxu0 0.0
  %985 = vmatpush1.msra.mxu0 0.0
  %986 = vmatprep.subr.mxu0 0.0
  %987 = vmatpush1.msra.mxu0 0.0
  %988 = vmatprep.subr.mxu0 0.0
  %989 = vmatpush1.msra.mxu0 0.0
  %990 = vmatprep.subr.mxu0 0.0
  %991 = vmatpush1.msra.mxu0 0.0
  %992 = vmatprep.subr.mxu0 0.0
  %993 = vmatpush1.msra.mxu0 0.0
  %994 = vmatprep.subr.mxu0 0.0
  %995 = vmatpush1.msra.mxu0 0.0
  %996 = vmatprep.subr.mxu0 0.0
  %997 = vmatpush1.msra.mxu0 0.0
  %998 = vmatprep.subr.mxu0 0.0
  %999 = vmatpush1.msra.mxu0 0.0
  %1000 = vmatprep.subr.mxu0 0.0
  %1001 = vmatpush1.msra.mxu0 0.0
  %1002 = vmatprep.subr.mxu0 0.0
  %1003 = vmatpush1.msra.mxu0 0.0
  %1004 = vmatprep.subr.mxu0 0.0
  %1005 = vmatpush1.msra.mxu0 0.0
  %1006 = vmatprep.subr.mxu0 0.0
  %1007 = vmatpush1.msra.mxu0 0.0
  %1008 = vmatprep.subr.mxu0 0.0
  %1009 = vmatpush1.msra.mxu0 0.0
  %1010 = vmatprep.subr.mxu0 0.0
  %1011 = vmatpush1.msra.mxu0 0.0
  %1012 = vmatprep.subr.mxu0 0.0
  %1013 = vmatpush1.msra.mxu0 0.0
  %1014 = vmatprep.subr.mxu0 0.0
  %1015 = vmatpush1.msra.mxu0 0.0
  %1016 = vmatprep.subr.mxu0 0.0
  %1017 = vmatpush1.msra.mxu0 0.0
  %1018 = vmatprep.subr.mxu0 0.0
  %1019 = vmatpush1.msra.mxu0 0.0
  %1020 = vmatprep.mubr.f32.mxu0 0.0
  %1021 = vmatmul.mubr.f32.gmra.mrb[0].mxu0 %v905
  %v1022 = vpop.f32.mrb[0].mxu0
  %v1023 = vadd.f32 %v901, %v1022
  %v1024 = vpop.f32.mrb[0].mxu0
  %1025 = vmatprep.mubr.f32.mxu0 0.0
  %1026 = vmatmul.mubr.f32.gmra.mrb[0].mxu0 %v908
  %v1027 = vpop.f32.mrb[0].mxu0
  %v1028 = vadd.f32 %v901, %v1027
  %v1029 = vpop.f32.mrb[0].mxu0
  %1030 = vmatprep.mubr.f32.mxu0 0.0
  %1031 = vmatmul.mubr.f32.gmra.mrb[0].mxu0 %v911
  %v1032 = vpop.f32.mrb[0].mxu0
  %v1033 = vadd.f32 %v901, %v1032
  %v1034 = vpop.f32.mrb[0].mxu0
  %1035 = vmatprep.mubr.f32.mxu0 0.0
  %1036 = vmatmul.mubr.f32.gmra.mrb[0].mxu0 %v914
  %v1037 = vpop.f32.mrb[0].mxu0
  %v1038 = vadd.f32 %v901, %v1037
  %v1039 = vpop.f32.mrb[0].mxu0
  %1040 = vmatprep.mubr.f32.mxu0 0.0
  %1041 = vmatmul.mubr.f32.gmra.mrb[0].mxu0 %v917
  %v1042 = vpop.f32.mrb[0].mxu0
  %v1043 = vadd.f32 %v901, %v1042
  %v1044 = vpop.f32.mrb[0].mxu0
  %1045 = vmatprep.mubr.f32.mxu0 0.0
  %1046 = vmatmul.mubr.f32.gmra.mrb[0].mxu0 %v920
  %v1047 = vpop.f32.mrb[0].mxu0
  %v1048 = vadd.f32 %v901, %v1047
  %v1049 = vpop.f32.mrb[0].mxu0
  %1050 = vmatprep.mubr.f32.mxu0 0.0
  %1051 = vmatmul.mubr.f32.gmra.mrb[0].mxu0 %v923
  %v1052 = vpop.f32.mrb[0].mxu0
  %v1053 = vadd.f32 %v901, %v1052
  %v1054 = vpop.f32.mrb[0].mxu0
  %1055 = vmatprep.mubr.f32.mxu0 0.0
  %1056 = vmatmul.mubr.f32.gmra.mrb[0].mxu0 %v926
  %v1057 = vpop.f32.mrb[0].mxu0
  %v1058 = vadd.f32 %v901, %v1057
  %v1059 = vpop.f32.mrb[0].mxu0
  %1060 = vmatprep.mubr.f32.mxu0 0.0
  %1061 = vmatmul.mubr.f32.gmra.mrb[0].mxu0 %v929
  %v1062 = vpop.f32.mrb[0].mxu0
  %v1063 = vadd.f32 %v901, %v1062
  %v1064 = vpop.f32.mrb[0].mxu0
  %1065 = vmatprep.mubr.f32.mxu0 0.0
  %1066 = vmatmul.mubr.f32.gmra.mrb[0].mxu0 %v932
  %v1067 = vpop.f32.mrb[0].mxu0
  %v1068 = vadd.f32 %v901, %v1067
  %v1069 = vpop.f32.mrb[0].mxu0
  %1070 = vmatprep.mubr.f32.mxu0 0.0
  %1071 = vmatmul.mubr.f32.gmra.mrb[0].mxu0 %v935
  %v1072 = vpop.f32.mrb[0].mxu0
  %v1073 = vadd.f32 %v901, %v1072
  %v1074 = vpop.f32.mrb[0].mxu0
  %1075 = vmatprep.mubr.f32.mxu0 0.0
  %1076 = vmatmul.mubr.f32.gmra.mrb[0].mxu0 %v938
  %v1077 = vpop.f32.mrb[0].mxu0
  %v1078 = vadd.f32 %v901, %v1077
  %v1079 = vpop.f32.mrb[0].mxu0
  %1080 = vmatprep.mubr.f32.mxu0 0.0
  %1081 = vmatmul.mubr.f32.gmra.mrb[0].mxu0 %v941
  %v1082 = vpop.f32.mrb[0].mxu0
  %v1083 = vadd.f32 %v901, %v1082
  %v1084 = vpop.f32.mrb[0].mxu0
  %1085 = vmatprep.mubr.f32.mxu0 0.0
  %1086 = vmatmul.mubr.f32.gmra.mrb[0].mxu0 %v944
  %v1087 = vpop.f32.mrb[0].mxu0
  %v1088 = vadd.f32 %v901, %v1087
  %v1089 = vpop.f32.mrb[0].mxu0
  %1090 = vmatprep.mubr.f32.mxu0 0.0
  %1091 = vmatmul.mubr.f32.gmra.mrb[0].mxu0 %v947
  %v1092 = vpop.f32.mrb[0].mxu0
  %v1093 = vadd.f32 %v901, %v1092
  %v1094 = vpop.f32.mrb[0].mxu0
  %1095 = vmatprep.mubr.f32.mxu0 0.0
  %1096 = vmatmul.mubr.f32.gmra.mrb[0].mxu0 %v950
  %v1097 = vpop.f32.mrb[0].mxu0
  %v1098 = vadd.f32 %v901, %v1097
  %v1099 = vpop.f32.mrb[0].mxu0
  %1100 = vdwg.mxu0
  %vm1101 = vcmask 48128
  %v1102 = vsel %vm1101, %v1023, 0.0
  %v1103 = vsel %vm1101, %v1028, 0.0
  %v1104 = vadd.f32 %v1102, %v1103
  %v1105 = vsel %vm1101, %v1033, 0.0
  %v1106 = vadd.f32 %v1104, %v1105
  %v1107 = vsel %vm1101, %v1038, 0.0
  %v1108 = vadd.f32 %v1106, %v1107
  %v1109 = vsel %vm1101, %v1043, 0.0
  %v1110 = vadd.f32 %v1108, %v1109
  %v1111 = vsel %vm1101, %v1048, 0.0
  %v1112 = vadd.f32 %v1110, %v1111
  %v1113 = vsel %vm1101, %v1053, 0.0
  %v1114 = vadd.f32 %v1112, %v1113
  %v1115 = vsel %vm1101, %v1058, 0.0
  %v1116 = vadd.f32 %v1114, %v1115
  %v1117 = vsel %vm1101, %v1063, 0.0
  %v1118 = vadd.f32 %v1116, %v1117
  %v1119 = vsel %vm1101, %v1068, 0.0
  %v1120 = vadd.f32 %v1118, %v1119
  %v1121 = vsel %vm1101, %v1073, 0.0
  %v1122 = vadd.f32 %v1120, %v1121
  %v1123 = vsel %vm1101, %v1078, 0.0
  %v1124 = vadd.f32 %v1122, %v1123
  %v1125 = vsel %vm1101, %v1083, 0.0
  %v1126 = vadd.f32 %v1124, %v1125
  %v1127 = vsel %vm1101, %v1088, 0.0
  %v1128 = vadd.f32 %v1126, %v1127
  %v1129 = vsel %vm1101, %v1093, 0.0
  %v1130 = vadd.f32 %v1128, %v1129
  %v1131 = vsel %vm1101, %v1098, 0.0
  %v1132 = vadd.f32 %v1130, %v1131
  %v1133 = vrot.slane %v1132, 4
  %v1134 = vadd.f32 %v1132, %v1133
  %v1135 = vrot.slane %v1134, 2
  %v1136 = vadd.f32 %v1134, %v1135
  %v1137 = vrot.slane %v1136, 1
  %v1138 = vadd.f32 %v1136, %v1137
  %v1139 = vmul.f32 %v1023, %v1023
  %v1140 = vmul.f32 %v1028, %v1028
  %v1141 = vmul.f32 %v1033, %v1033
  %v1142 = vmul.f32 %v1038, %v1038
  %v1143 = vmul.f32 %v1043, %v1043
  %v1144 = vmul.f32 %v1048, %v1048
  %v1145 = vmul.f32 %v1053, %v1053
  %v1146 = vmul.f32 %v1058, %v1058
  %v1147 = vmul.f32 %v1063, %v1063
  %v1148 = vmul.f32 %v1068, %v1068
  %v1149 = vmul.f32 %v1073, %v1073
  %v1150 = vmul.f32 %v1078, %v1078
  %v1151 = vmul.f32 %v1083, %v1083
  %v1152 = vmul.f32 %v1088, %v1088
  %v1153 = vmul.f32 %v1093, %v1093
  %v1154 = vmul.f32 %v1098, %v1098
  %v1155 = vsel %vm1101, %v1139, 0.0
  %v1156 = vsel %vm1101, %v1140, 0.0
  %v1157 = vadd.f32 %v1155, %v1156
  %v1158 = vsel %vm1101, %v1141, 0.0
  %v1159 = vadd.f32 %v1157, %v1158
  %v1160 = vsel %vm1101, %v1142, 0.0
  %v1161 = vadd.f32 %v1159, %v1160
  %v1162 = vsel %vm1101, %v1143, 0.0
  %v1163 = vadd.f32 %v1161, %v1162
  %v1164 = vsel %vm1101, %v1144, 0.0
  %v1165 = vadd.f32 %v1163, %v1164
  %v1166 = vsel %vm1101, %v1145, 0.0
  %v1167 = vadd.f32 %v1165, %v1166
  %v1168 = vsel %vm1101, %v1146, 0.0
  %v1169 = vadd.f32 %v1167, %v1168
  %v1170 = vsel %vm1101, %v1147, 0.0
  %v1171 = vadd.f32 %v1169, %v1170
  %v1172 = vsel %vm1101, %v1148, 0.0
  %v1173 = vadd.f32 %v1171, %v1172
  %v1174 = vsel %vm1101, %v1149, 0.0
  %v1175 = vadd.f32 %v1173, %v1174
  %v1176 = vsel %vm1101, %v1150, 0.0
  %v1177 = vadd.f32 %v1175, %v1176
  %v1178 = vsel %vm1101, %v1151, 0.0
  %v1179 = vadd.f32 %v1177, %v1178
  %v1180 = vsel %vm1101, %v1152, 0.0
  %v1181 = vadd.f32 %v1179, %v1180
  %v1182 = vsel %vm1101, %v1153, 0.0
  %v1183 = vadd.f32 %v1181, %v1182
  %v1184 = vsel %vm1101, %v1154, 0.0
  %v1185 = vadd.f32 %v1183, %v1184
  %v1186 = vrot.slane %v1185, 4
  %v1187 = vadd.f32 %v1185, %v1186
  %v1188 = vrot.slane %v1187, 2
  %v1189 = vadd.f32 %v1187, %v1188
  %v1190 = vrot.slane %v1189, 1
  %v1191 = vadd.f32 %v1189, %v1190
  %v1192 = vmul.f32 %v1138, 0.0078125
  %v1193 = vmul.f32 %v1191, 0.0078125
  %v1194 = vmul.f32 %v1192, %v1192
  %v1195 = vsub.f32 %v1193, %v1194
  %v1196 = vsub.f32 %v1023, %v1192
  %v1197 = vsub.f32 %v1028, %v1192
  %v1198 = vsub.f32 %v1033, %v1192
  %v1199 = vsub.f32 %v1038, %v1192
  %v1200 = vsub.f32 %v1043, %v1192
  %v1201 = vsub.f32 %v1048, %v1192
  %v1202 = vsub.f32 %v1053, %v1192
  %v1203 = vsub.f32 %v1058, %v1192
  %v1204 = vsub.f32 %v1063, %v1192
  %v1205 = vsub.f32 %v1068, %v1192
  %v1206 = vsub.f32 %v1073, %v1192
  %v1207 = vsub.f32 %v1078, %v1192
  %v1208 = vsub.f32 %v1083, %v1192
  %v1209 = vsub.f32 %v1088, %v1192
  %v1210 = vsub.f32 %v1093, %v1192
  %v1211 = vsub.f32 %v1098, %v1192
  %v1212 = vadd.f32 %v1195, 1e-05
  %v1213 = vrsqrt.pop %v1212
  %v1214 = vmul.f32 %v1196, %v1213
  %v1215 = vmul.f32 %v1197, %v1213
  %v1216 = vmul.f32 %v1198, %v1213
  %v1217 = vmul.f32 %v1199, %v1213
  %v1218 = vmul.f32 %v1200, %v1213
  %v1219 = vmul.f32 %v1201, %v1213
  %v1220 = vmul.f32 %v1202, %v1213
  %v1221 = vmul.f32 %v1203, %v1213
  %v1222 = vmul.f32 %v1204, %v1213
  %v1223 = vmul.f32 %v1205, %v1213
  %v1224 = vmul.f32 %v1206, %v1213
  %v1225 = vmul.f32 %v1207, %v1213
  %v1226 = vmul.f32 %v1208, %v1213
  %v1227 = vmul.f32 %v1209, %v1213
  %v1228 = vmul.f32 %v1210, %v1213
  %v1229 = vmul.f32 %v1211, %v1213
  %v1231 = vlaneseq
  %v1232 = vshrl.u32 %v1231, 7
  %v1233 = vsub.s32 0, %v1232
  %v1234 = vrot.slane %v166, %v1233
  %v1236 = vmul.f32 %v1214, %v1234
  %v1237 = vmul.f32 %v1215, %v1234
  %v1238 = vmul.f32 %v1216, %v1234
  %v1239 = vmul.f32 %v1217, %v1234
  %v1240 = vmul.f32 %v1218, %v1234
  %v1241 = vmul.f32 %v1219, %v1234
  %v1242 = vmul.f32 %v1220, %v1234
  %v1243 = vmul.f32 %v1221, %v1234
  %v1244 = vmul.f32 %v1222, %v1234
  %v1245 = vmul.f32 %v1223, %v1234
  %v1246 = vmul.f32 %v1224, %v1234
  %v1247 = vmul.f32 %v1225, %v1234
  %v1248 = vmul.f32 %v1226, %v1234
  %v1249 = vmul.f32 %v1227, %v1234
  %v1250 = vmul.f32 %v1228, %v1234
  %v1251 = vmul.f32 %v1229, %v1234
  %v1253 = vlaneseq
  %v1254 = vshrl.u32 %v1253, 7
  %v1255 = vsub.s32 0, %v1254
  %v1256 = vrot.slane %v167, %v1255
  %v1258 = vadd.f32 %v1236, %v1256
  %v1259 = vadd.f32 %v1237, %v1256
  %v1260 = vadd.f32 %v1238, %v1256
  %v1261 = vadd.f32 %v1239, %v1256
  %v1262 = vadd.f32 %v1240, %v1256
  %v1263 = vadd.f32 %v1241, %v1256
  %v1264 = vadd.f32 %v1242, %v1256
  %v1265 = vadd.f32 %v1243, %v1256
  %v1266 = vadd.f32 %v1244, %v1256
  %v1267 = vadd.f32 %v1245, %v1256
  %v1268 = vadd.f32 %v1246, %v1256
  %v1269 = vadd.f32 %v1247, %v1256
  %v1270 = vadd.f32 %v1248, %v1256
  %v1271 = vadd.f32 %v1249, %v1256
  %v1272 = vadd.f32 %v1250, %v1256
  %v1273 = vadd.f32 %v1251, %v1256
  %v1274 = vld [vmem:[%s5] sm:$0xff]
  %v1275 = vld [vmem:[%s5 + $0x8] sm:$0xff]
  %v1276 = vld [vmem:[%s5 + $0x10] sm:$0xff]
  %v1277 = vld [vmem:[%s5 + $0x18] sm:$0xff]
  %v1278 = vld [vmem:[%s5 + $0x20] sm:$0xff]
  %v1279 = vld [vmem:[%s5 + $0x28] sm:$0xff]
  %v1280 = vld [vmem:[%s5 + $0x30] sm:$0x3f]
  %v1281 = vld [vmem:[%s6] sm:$0x1]
  %v1282 = vld [vmem:[%s7] sm:$0x1]
  %v1283 = vld [vmem:[%s8] sm:$0x1]
  %v1300 = vrot.slane %v1258, 7
  %v1301 = vrot.slane %v1259, 7
  %v1302 = vrot.slane %v1260, 7
  %v1303 = vrot.slane %v1261, 7
  %v1304 = vrot.slane %v1262, 7
  %v1305 = vrot.slane %v1263, 7
  %v1306 = vrot.slane %v1264, 7
  %v1307 = vrot.slane %v1265, 7
  %v1308 = vrot.slane %v1266, 7
  %v1309 = vrot.slane %v1267, 7
  %v1310 = vrot.slane %v1268, 7
  %v1311 = vrot.slane %v1269, 7
  %v1312 = vrot.slane %v1270, 7
  %v1313 = vrot.slane %v1271, 7
  %v1314 = vrot.slane %v1272, 7
  %v1315 = vrot.slane %v1273, 7
  %v1332 = vrot.slane %v1258, 6
  %v1333 = vrot.slane %v1259, 6
  %v1334 = vrot.slane %v1260, 6
  %v1335 = vrot.slane %v1261, 6
  %v1336 = vrot.slane %v1262, 6
  %v1337 = vrot.slane %v1263, 6
  %v1338 = vrot.slane %v1264, 6
  %v1339 = vrot.slane %v1265, 6
  %v1340 = vrot.slane %v1266, 6
  %v1341 = vrot.slane %v1267, 6
  %v1342 = vrot.slane %v1268, 6
  %v1343 = vrot.slane %v1269, 6
  %v1344 = vrot.slane %v1270, 6
  %v1345 = vrot.slane %v1271, 6
  %v1346 = vrot.slane %v1272, 6
  %v1347 = vrot.slane %v1273, 6
  %v1364 = vsel %vm248, %v1258, %v1300
  %v1365 = vsel %vm248, %v1259, %v1301
  %v1366 = vsel %vm248, %v1260, %v1302
  %v1367 = vsel %vm248, %v1261, %v1303
  %v1368 = vsel %vm248, %v1262, %v1304
  %v1369 = vsel %vm248, %v1263, %v1305
  %v1370 = vsel %vm248, %v1264, %v1306
  %v1371 = vsel %vm248, %v1265, %v1307
  %v1372 = vsel %vm248, %v1266, %v1308
  %v1373 = vsel %vm248, %v1267, %v1309
  %v1374 = vsel %vm248, %v1268, %v1310
  %v1375 = vsel %vm248, %v1269, %v1311
  %v1376 = vsel %vm248, %v1270, %v1312
  %v1377 = vsel %vm248, %v1271, %v1313
  %v1378 = vsel %vm248, %v1272, %v1314
  %v1379 = vsel %vm248, %v1273, %v1315
  %v1380 = vsel %vm248, %v1300, %v1332
  %v1381 = vsel %vm248, %v1301, %v1333
  %v1382 = vsel %vm248, %v1302, %v1334
  %v1383 = vsel %vm248, %v1303, %v1335
  %v1384 = vsel %vm248, %v1304, %v1336
  %v1385 = vsel %vm248, %v1305, %v1337
  %v1386 = vsel %vm248, %v1306, %v1338
  %v1387 = vsel %vm248, %v1307, %v1339
  %v1388 = vsel %vm248, %v1308, %v1340
  %v1389 = vsel %vm248, %v1309, %v1341
  %v1390 = vsel %vm248, %v1310, %v1342
  %v1391 = vsel %vm248, %v1311, %v1343
  %v1392 = vsel %vm248, %v1312, %v1344
  %v1393 = vsel %vm248, %v1313, %v1345
  %v1394 = vsel %vm248, %v1314, %v1346
  %v1395 = vsel %vm248, %v1315, %v1347
  %v1424 = vrot.slane %v1364, 1
  %v1425 = vrot.slane %v1380, 1
  %v1426 = vsel %vm309, %v1424, %v1425
  %v1427 = vrot.slane %v1365, 1
  %v1428 = vrot.slane %v1381, 1
  %v1429 = vsel %vm309, %v1427, %v1428
  %v1430 = vrot.slane %v1366, 1
  %v1431 = vrot.slane %v1382, 1
  %v1432 = vsel %vm309, %v1430, %v1431
  %v1433 = vrot.slane %v1367, 1
  %v1434 = vrot.slane %v1383, 1
  %v1435 = vsel %vm309, %v1433, %v1434
  %v1436 = vrot.slane %v1368, 1
  %v1437 = vrot.slane %v1384, 1
  %v1438 = vsel %vm309, %v1436, %v1437
  %v1439 = vrot.slane %v1369, 1
  %v1440 = vrot.slane %v1385, 1
  %v1441 = vsel %vm309, %v1439, %v1440
  %v1442 = vrot.slane %v1370, 1
  %v1443 = vrot.slane %v1386, 1
  %v1444 = vsel %vm309, %v1442, %v1443
  %v1445 = vrot.slane %v1372, 1
  %v1446 = vrot.slane %v1388, 1
  %v1447 = vsel %vm309, %v1445, %v1446
  %v1448 = vrot.slane %v1373, 1
  %v1449 = vrot.slane %v1389, 1
  %v1450 = vsel %vm309, %v1448, %v1449
  %v1451 = vrot.slane %v1374, 1
  %v1452 = vrot.slane %v1390, 1
  %v1453 = vsel %vm309, %v1451, %v1452
  %v1454 = vrot.slane %v1375, 1
  %v1455 = vrot.slane %v1391, 1
  %v1456 = vsel %vm309, %v1454, %v1455
  %v1457 = vrot.slane %v1376, 1
  %v1458 = vrot.slane %v1392, 1
  %v1459 = vsel %vm309, %v1457, %v1458
  %v1460 = vrot.slane %v1377, 1
  %v1461 = vrot.slane %v1393, 1
  %v1462 = vsel %vm309, %v1460, %v1461
  %v1463 = vrot.slane %v1378, 1
  %v1464 = vrot.slane %v1394, 1
  %v1465 = vsel %vm309, %v1463, %v1464
  %1466 = vrot.lane.b32.xlu0 %v1426, 6
  %v1467 = vpop.permute.xlu0 %1466
  %1468 = vrot.lane.b32.xlu0 %v1429, 6
  %v1469 = vpop.permute.xlu0 %1468
  %1470 = vrot.lane.b32.xlu0 %v1432, 6
  %v1471 = vpop.permute.xlu0 %1470
  %1472 = vrot.lane.b32.xlu0 %v1435, 6
  %v1473 = vpop.permute.xlu0 %1472
  %1474 = vrot.lane.b32.xlu0 %v1438, 6
  %v1475 = vpop.permute.xlu0 %1474
  %1476 = vrot.lane.b32.xlu0 %v1441, 6
  %v1477 = vpop.permute.xlu0 %1476
  %1478 = vrot.lane.b32.xlu0 %v1444, 6
  %v1479 = vpop.permute.xlu0 %1478
  %1480 = vrot.lane.b32.xlu0 %v1447, 6
  %v1481 = vpop.permute.xlu0 %1480
  %1482 = vrot.lane.b32.xlu0 %v1450, 6
  %v1483 = vpop.permute.xlu0 %1482
  %1484 = vrot.lane.b32.xlu0 %v1453, 6
  %v1485 = vpop.permute.xlu0 %1484
  %1486 = vrot.lane.b32.xlu0 %v1456, 6
  %v1487 = vpop.permute.xlu0 %1486
  %1488 = vrot.lane.b32.xlu0 %v1459, 6
  %v1489 = vpop.permute.xlu0 %1488
  %1490 = vrot.lane.b32.xlu0 %v1462, 6
  %v1491 = vpop.permute.xlu0 %1490
  %1492 = vrot.lane.b32.xlu0 %v1465, 6
  %v1493 = vpop.permute.xlu0 %1492
  %v1508 = vrot.slane %v1364, 2
  %v1509 = vrot.slane %v1380, 2
  %v1510 = vsel %vm394, %v1508, %v1509
  %v1511 = vrot.slane %v1365, 2
  %v1512 = vrot.slane %v1381, 2
  %v1513 = vsel %vm394, %v1511, %v1512
  %v1514 = vrot.slane %v1366, 2
  %v1515 = vrot.slane %v1382, 2
  %v1516 = vsel %vm394, %v1514, %v1515
  %v1517 = vrot.slane %v1367, 2
  %v1518 = vrot.slane %v1383, 2
  %v1519 = vsel %vm394, %v1517, %v1518
  %v1520 = vrot.slane %v1368, 2
  %v1521 = vrot.slane %v1384, 2
  %v1522 = vsel %vm394, %v1520, %v1521
  %v1523 = vrot.slane %v1369, 2
  %v1524 = vrot.slane %v1385, 2
  %v1525 = vsel %vm394, %v1523, %v1524
  %v1526 = vrot.slane %v1370, 2
  %v1527 = vrot.slane %v1386, 2
  %v1528 = vsel %vm394, %v1526, %v1527
  %v1529 = vrot.slane %v1372, 2
  %v1530 = vrot.slane %v1388, 2
  %v1531 = vsel %vm394, %v1529, %v1530
  %v1532 = vrot.slane %v1373, 2
  %v1533 = vrot.slane %v1389, 2
  %v1534 = vsel %vm394, %v1532, %v1533
  %v1535 = vrot.slane %v1374, 2
  %v1536 = vrot.slane %v1390, 2
  %v1537 = vsel %vm394, %v1535, %v1536
  %v1538 = vrot.slane %v1375, 2
  %v1539 = vrot.slane %v1391, 2
  %v1540 = vsel %vm394, %v1538, %v1539
  %v1541 = vrot.slane %v1376, 2
  %v1542 = vrot.slane %v1392, 2
  %v1543 = vsel %vm394, %v1541, %v1542
  %v1544 = vrot.slane %v1377, 2
  %v1545 = vrot.slane %v1393, 2
  %v1546 = vsel %vm394, %v1544, %v1545
  %v1547 = vrot.slane %v1378, 2
  %v1548 = vrot.slane %v1394, 2
  %v1549 = vsel %vm394, %v1547, %v1548
  %1550 = vrot.lane.b32.xlu0 %v1510, 12
  %v1551 = vpop.permute.xlu0 %1550
  %1552 = vrot.lane.b32.xlu0 %v1513, 12
  %v1553 = vpop.permute.xlu0 %1552
  %1554 = vrot.lane.b32.xlu0 %v1516, 12
  %v1555 = vpop.permute.xlu0 %1554
  %1556 = vrot.lane.b32.xlu0 %v1519, 12
  %v1557 = vpop.permute.xlu0 %1556
  %1558 = vrot.lane.b32.xlu0 %v1522, 12
  %v1559 = vpop.permute.xlu0 %1558
  %1560 = vrot.lane.b32.xlu0 %v1525, 12
  %v1561 = vpop.permute.xlu0 %1560
  %1562 = vrot.lane.b32.xlu0 %v1528, 12
  %v1563 = vpop.permute.xlu0 %1562
  %1564 = vrot.lane.b32.xlu0 %v1531, 12
  %v1565 = vpop.permute.xlu0 %1564
  %1566 = vrot.lane.b32.xlu0 %v1534, 12
  %v1567 = vpop.permute.xlu0 %1566
  %1568 = vrot.lane.b32.xlu0 %v1537, 12
  %v1569 = vpop.permute.xlu0 %1568
  %1570 = vrot.lane.b32.xlu0 %v1540, 12
  %v1571 = vpop.permute.xlu0 %1570
  %1572 = vrot.lane.b32.xlu0 %v1543, 12
  %v1573 = vpop.permute.xlu0 %1572
  %1574 = vrot.lane.b32.xlu0 %v1546, 12
  %v1575 = vpop.permute.xlu0 %1574
  %1576 = vrot.lane.b32.xlu0 %v1549, 12
  %v1577 = vpop.permute.xlu0 %1576
  %1594 = vrot.lane.b32.xlu0 %v1364, 18
  %v1595 = vpop.permute.xlu0 %1594
  %1596 = vrot.lane.b32.xlu0 %v1365, 18
  %v1597 = vpop.permute.xlu0 %1596
  %1598 = vrot.lane.b32.xlu0 %v1366, 18
  %v1599 = vpop.permute.xlu0 %1598
  %1600 = vrot.lane.b32.xlu0 %v1367, 18
  %v1601 = vpop.permute.xlu0 %1600
  %1602 = vrot.lane.b32.xlu0 %v1368, 18
  %v1603 = vpop.permute.xlu0 %1602
  %1604 = vrot.lane.b32.xlu0 %v1369, 18
  %v1605 = vpop.permute.xlu0 %1604
  %1606 = vrot.lane.b32.xlu0 %v1370, 18
  %v1607 = vpop.permute.xlu0 %1606
  %1608 = vrot.lane.b32.xlu0 %v1371, 18
  %v1609 = vpop.permute.xlu0 %1608
  %1610 = vrot.lane.b32.xlu0 %v1372, 18
  %v1611 = vpop.permute.xlu0 %1610
  %1612 = vrot.lane.b32.xlu0 %v1373, 18
  %v1613 = vpop.permute.xlu0 %1612
  %1614 = vrot.lane.b32.xlu0 %v1374, 18
  %v1615 = vpop.permute.xlu0 %1614
  %1616 = vrot.lane.b32.xlu0 %v1375, 18
  %v1617 = vpop.permute.xlu0 %1616
  %1618 = vrot.lane.b32.xlu0 %v1376, 18
  %v1619 = vpop.permute.xlu0 %1618
  %1620 = vrot.lane.b32.xlu0 %v1377, 18
  %v1621 = vpop.permute.xlu0 %1620
  %1622 = vrot.lane.b32.xlu0 %v1378, 18
  %v1623 = vpop.permute.xlu0 %1622
  %1624 = vrot.lane.b32.xlu0 %v1379, 18
  %v1625 = vpop.permute.xlu0 %1624
  %v1644 = vrot.slane %v1371, 1
  %v1645 = vrot.slane %v1387, 1
  %v1646 = vsel %vm309, %v1644, %v1645
  %v1647 = vrot.slane %v1379, 1
  %v1648 = vrot.slane %v1395, 1
  %v1649 = vsel %vm309, %v1647, %v1648
  %1650 = vrot.lane.b32.xlu0 %v1426, 24
  %v1651 = vpop.permute.xlu0 %1650
  %1652 = vrot.lane.b32.xlu0 %v1429, 24
  %v1653 = vpop.permute.xlu0 %1652
  %1654 = vrot.lane.b32.xlu0 %v1432, 24
  %v1655 = vpop.permute.xlu0 %1654
  %1656 = vrot.lane.b32.xlu0 %v1435, 24
  %v1657 = vpop.permute.xlu0 %1656
  %1658 = vrot.lane.b32.xlu0 %v1438, 24
  %v1659 = vpop.permute.xlu0 %1658
  %1660 = vrot.lane.b32.xlu0 %v1441, 24
  %v1661 = vpop.permute.xlu0 %1660
  %1662 = vrot.lane.b32.xlu0 %v1444, 24
  %v1663 = vpop.permute.xlu0 %1662
  %1664 = vrot.lane.b32.xlu0 %v1646, 24
  %v1665 = vpop.permute.xlu0 %1664
  %1666 = vrot.lane.b32.xlu0 %v1447, 24
  %v1667 = vpop.permute.xlu0 %1666
  %1668 = vrot.lane.b32.xlu0 %v1450, 24
  %v1669 = vpop.permute.xlu0 %1668
  %1670 = vrot.lane.b32.xlu0 %v1453, 24
  %v1671 = vpop.permute.xlu0 %1670
  %1672 = vrot.lane.b32.xlu0 %v1456, 24
  %v1673 = vpop.permute.xlu0 %1672
  %1674 = vrot.lane.b32.xlu0 %v1459, 24
  %v1675 = vpop.permute.xlu0 %1674
  %1676 = vrot.lane.b32.xlu0 %v1462, 24
  %v1677 = vpop.permute.xlu0 %1676
  %1678 = vrot.lane.b32.xlu0 %v1465, 24
  %v1679 = vpop.permute.xlu0 %1678
  %1680 = vrot.lane.b32.xlu0 %v1649, 24
  %v1681 = vpop.permute.xlu0 %1680
  %v1698 = vrot.slane %v1371, 2
  %v1699 = vrot.slane %v1387, 2
  %v1700 = vsel %vm394, %v1698, %v1699
  %v1701 = vrot.slane %v1379, 2
  %v1702 = vrot.slane %v1395, 2
  %v1703 = vsel %vm394, %v1701, %v1702
  %1704 = vrot.lane.b32.xlu0 %v1510, 30
  %v1705 = vpop.permute.xlu0 %1704
  %1706 = vrot.lane.b32.xlu0 %v1513, 30
  %v1707 = vpop.permute.xlu0 %1706
  %1708 = vrot.lane.b32.xlu0 %v1516, 30
  %v1709 = vpop.permute.xlu0 %1708
  %1710 = vrot.lane.b32.xlu0 %v1519, 30
  %v1711 = vpop.permute.xlu0 %1710
  %1712 = vrot.lane.b32.xlu0 %v1522, 30
  %v1713 = vpop.permute.xlu0 %1712
  %1714 = vrot.lane.b32.xlu0 %v1525, 30
  %v1715 = vpop.permute.xlu0 %1714
  %1716 = vrot.lane.b32.xlu0 %v1528, 30
  %v1717 = vpop.permute.xlu0 %1716
  %1718 = vrot.lane.b32.xlu0 %v1700, 30
  %v1719 = vpop.permute.xlu0 %1718
  %1720 = vrot.lane.b32.xlu0 %v1531, 30
  %v1721 = vpop.permute.xlu0 %1720
  %1722 = vrot.lane.b32.xlu0 %v1534, 30
  %v1723 = vpop.permute.xlu0 %1722
  %1724 = vrot.lane.b32.xlu0 %v1537, 30
  %v1725 = vpop.permute.xlu0 %1724
  %1726 = vrot.lane.b32.xlu0 %v1540, 30
  %v1727 = vpop.permute.xlu0 %1726
  %1728 = vrot.lane.b32.xlu0 %v1543, 30
  %v1729 = vpop.permute.xlu0 %1728
  %1730 = vrot.lane.b32.xlu0 %v1546, 30
  %v1731 = vpop.permute.xlu0 %1730
  %1732 = vrot.lane.b32.xlu0 %v1549, 30
  %v1733 = vpop.permute.xlu0 %1732
  %1734 = vrot.lane.b32.xlu0 %v1703, 30
  %v1735 = vpop.permute.xlu0 %1734
  %1752 = vrot.lane.b32.xlu0 %v1365, 36
  %v1753 = vpop.permute.xlu0 %1752
  %1754 = vrot.lane.b32.xlu0 %v1366, 36
  %v1755 = vpop.permute.xlu0 %1754
  %1756 = vrot.lane.b32.xlu0 %v1367, 36
  %v1757 = vpop.permute.xlu0 %1756
  %1758 = vrot.lane.b32.xlu0 %v1368, 36
  %v1759 = vpop.permute.xlu0 %1758
  %1760 = vrot.lane.b32.xlu0 %v1369, 36
  %v1761 = vpop.permute.xlu0 %1760
  %1762 = vrot.lane.b32.xlu0 %v1370, 36
  %v1763 = vpop.permute.xlu0 %1762
  %1764 = vrot.lane.b32.xlu0 %v1371, 36
  %v1765 = vpop.permute.xlu0 %1764
  %1766 = vrot.lane.b32.xlu0 %v1373, 36
  %v1767 = vpop.permute.xlu0 %1766
  %1768 = vrot.lane.b32.xlu0 %v1374, 36
  %v1769 = vpop.permute.xlu0 %1768
  %1770 = vrot.lane.b32.xlu0 %v1375, 36
  %v1771 = vpop.permute.xlu0 %1770
  %1772 = vrot.lane.b32.xlu0 %v1376, 36
  %v1773 = vpop.permute.xlu0 %1772
  %1774 = vrot.lane.b32.xlu0 %v1377, 36
  %v1775 = vpop.permute.xlu0 %1774
  %1776 = vrot.lane.b32.xlu0 %v1378, 36
  %v1777 = vpop.permute.xlu0 %1776
  %1778 = vrot.lane.b32.xlu0 %v1379, 36
  %v1779 = vpop.permute.xlu0 %1778
  %1794 = vrot.lane.b32.xlu0 %v1429, 42
  %v1795 = vpop.permute.xlu0 %1794
  %1796 = vrot.lane.b32.xlu0 %v1432, 42
  %v1797 = vpop.permute.xlu0 %1796
  %1798 = vrot.lane.b32.xlu0 %v1435, 42
  %v1799 = vpop.permute.xlu0 %1798
  %1800 = vrot.lane.b32.xlu0 %v1438, 42
  %v1801 = vpop.permute.xlu0 %1800
  %1802 = vrot.lane.b32.xlu0 %v1441, 42
  %v1803 = vpop.permute.xlu0 %1802
  %1804 = vrot.lane.b32.xlu0 %v1444, 42
  %v1805 = vpop.permute.xlu0 %1804
  %1806 = vrot.lane.b32.xlu0 %v1646, 42
  %v1807 = vpop.permute.xlu0 %1806
  %1808 = vrot.lane.b32.xlu0 %v1450, 42
  %v1809 = vpop.permute.xlu0 %1808
  %1810 = vrot.lane.b32.xlu0 %v1453, 42
  %v1811 = vpop.permute.xlu0 %1810
  %1812 = vrot.lane.b32.xlu0 %v1456, 42
  %v1813 = vpop.permute.xlu0 %1812
  %1814 = vrot.lane.b32.xlu0 %v1459, 42
  %v1815 = vpop.permute.xlu0 %1814
  %1816 = vrot.lane.b32.xlu0 %v1462, 42
  %v1817 = vpop.permute.xlu0 %1816
  %1818 = vrot.lane.b32.xlu0 %v1465, 42
  %v1819 = vpop.permute.xlu0 %1818
  %1820 = vrot.lane.b32.xlu0 %v1649, 42
  %v1821 = vpop.permute.xlu0 %1820
  %1836 = vrot.lane.b32.xlu0 %v1513, 48
  %v1837 = vpop.permute.xlu0 %1836
  %1838 = vrot.lane.b32.xlu0 %v1516, 48
  %v1839 = vpop.permute.xlu0 %1838
  %1840 = vrot.lane.b32.xlu0 %v1519, 48
  %v1841 = vpop.permute.xlu0 %1840
  %1842 = vrot.lane.b32.xlu0 %v1522, 48
  %v1843 = vpop.permute.xlu0 %1842
  %1844 = vrot.lane.b32.xlu0 %v1525, 48
  %v1845 = vpop.permute.xlu0 %1844
  %1846 = vrot.lane.b32.xlu0 %v1528, 48
  %v1847 = vpop.permute.xlu0 %1846
  %1848 = vrot.lane.b32.xlu0 %v1700, 48
  %v1849 = vpop.permute.xlu0 %1848
  %1850 = vrot.lane.b32.xlu0 %v1534, 48
  %v1851 = vpop.permute.xlu0 %1850
  %1852 = vrot.lane.b32.xlu0 %v1537, 48
  %v1853 = vpop.permute.xlu0 %1852
  %1854 = vrot.lane.b32.xlu0 %v1540, 48
  %v1855 = vpop.permute.xlu0 %1854
  %1856 = vrot.lane.b32.xlu0 %v1543, 48
  %v1857 = vpop.permute.xlu0 %1856
  %1858 = vrot.lane.b32.xlu0 %v1546, 48
  %v1859 = vpop.permute.xlu0 %1858
  %1860 = vrot.lane.b32.xlu0 %v1549, 48
  %v1861 = vpop.permute.xlu0 %1860
  %1862 = vrot.lane.b32.xlu0 %v1703, 48
  %v1863 = vpop.permute.xlu0 %1862
  %v1878 = vsel %vm1101, %v1364, %v1467
  %v1879 = vsel %vm1101, %v1365, %v1469
  %v1880 = vsel %vm1101, %v1366, %v1471
  %v1881 = vsel %vm1101, %v1367, %v1473
  %v1882 = vsel %vm1101, %v1368, %v1475
  %v1883 = vsel %vm1101, %v1369, %v1477
  %v1884 = vsel %vm1101, %v1370, %v1479
  %v1885 = vsel %vm1101, %v1372, %v1481
  %v1886 = vsel %vm1101, %v1373, %v1483
  %v1887 = vsel %vm1101, %v1374, %v1485
  %v1888 = vsel %vm1101, %v1375, %v1487
  %v1889 = vsel %vm1101, %v1376, %v1489
  %v1890 = vsel %vm1101, %v1377, %v1491
  %v1891 = vsel %vm1101, %v1378, %v1493
  %v1892 = vsel %vm795, %v1878, %v1551
  %v1893 = vsel %vm795, %v1879, %v1553
  %v1894 = vsel %vm795, %v1880, %v1555
  %v1895 = vsel %vm795, %v1881, %v1557
  %v1896 = vsel %vm795, %v1882, %v1559
  %v1897 = vsel %vm795, %v1883, %v1561
  %v1898 = vsel %vm795, %v1884, %v1563
  %v1899 = vsel %vm795, %v1885, %v1565
  %v1900 = vsel %vm795, %v1886, %v1567
  %v1901 = vsel %vm795, %v1887, %v1569
  %v1902 = vsel %vm795, %v1888, %v1571
  %v1903 = vsel %vm795, %v1889, %v1573
  %v1904 = vsel %vm795, %v1890, %v1575
  %v1905 = vsel %vm795, %v1891, %v1577
  %vm1906 = vcmask 146432
  %v1907 = vsel %vm1906, %v1892, %v1595
  %v1908 = vsel %vm1906, %v1892, %v1597
  %v1909 = vsel %vm1906, %v1893, %v1599
  %v1910 = vsel %vm1906, %v1894, %v1601
  %v1911 = vsel %vm1906, %v1895, %v1603
  %v1912 = vsel %vm1906, %v1896, %v1605
  %v1913 = vsel %vm1906, %v1897, %v1607
  %v1914 = vsel %vm1906, %v1898, %v1609
  %v1915 = vsel %vm1906, %v1899, %v1611
  %v1916 = vsel %vm1906, %v1899, %v1613
  %v1917 = vsel %vm1906, %v1900, %v1615
  %v1918 = vsel %vm1906, %v1901, %v1617
  %v1919 = vsel %vm1906, %v1902, %v1619
  %v1920 = vsel %vm1906, %v1903, %v1621
  %v1921 = vsel %vm1906, %v1904, %v1623
  %v1922 = vsel %vm1906, %v1905, %v1625
  %v1923 = vsel %vm846, %v1907, %v1651
  %v1924 = vsel %vm846, %v1908, %v1653
  %v1925 = vsel %vm846, %v1909, %v1655
  %v1926 = vsel %vm846, %v1910, %v1657
  %v1927 = vsel %vm846, %v1911, %v1659
  %v1928 = vsel %vm846, %v1912, %v1661
  %v1929 = vsel %vm846, %v1913, %v1663
  %v1930 = vsel %vm846, %v1914, %v1665
  %v1931 = vsel %vm846, %v1915, %v1667
  %v1932 = vsel %vm846, %v1916, %v1669
  %v1933 = vsel %vm846, %v1917, %v1671
  %v1934 = vsel %vm846, %v1918, %v1673
  %v1935 = vsel %vm846, %v1919, %v1675
  %v1936 = vsel %vm846, %v1920, %v1677
  %v1937 = vsel %vm846, %v1921, %v1679
  %v1938 = vsel %vm846, %v1922, %v1681
  %vm1939 = vcmask 244736
  %v1940 = vsel %vm1939, %v1923, %v1705
  %v1941 = vsel %vm1939, %v1924, %v1707
  %v1942 = vsel %vm1939, %v1925, %v1709
  %v1943 = vsel %vm1939, %v1926, %v1711
  %v1944 = vsel %vm1939, %v1927, %v1713
  %v1945 = vsel %vm1939, %v1928, %v1715
  %v1946 = vsel %vm1939, %v1929, %v1717
  %v1947 = vsel %vm1939, %v1930, %v1719
  %v1948 = vsel %vm1939, %v1931, %v1721
  %v1949 = vsel %vm1939, %v1932, %v1723
  %v1950 = vsel %vm1939, %v1933, %v1725
  %v1951 = vsel %vm1939, %v1934, %v1727
  %v1952 = vsel %vm1939, %v1935, %v1729
  %v1953 = vsel %vm1939, %v1936, %v1731
  %v1954 = vsel %vm1939, %v1937, %v1733
  %v1955 = vsel %vm1939, %v1938, %v1735
  %v1956 = vsel %vm903, %v1940, %v1753
  %v1957 = vsel %vm903, %v1941, %v1755
  %v1958 = vsel %vm903, %v1942, %v1757
  %v1959 = vsel %vm903, %v1943, %v1759
  %v1960 = vsel %vm903, %v1944, %v1761
  %v1961 = vsel %vm903, %v1945, %v1763
  %v1962 = vsel %vm903, %v1946, %v1765
  %v1963 = vsel %vm903, %v1947, %v1765
  %v1964 = vsel %vm903, %v1948, %v1767
  %v1965 = vsel %vm903, %v1949, %v1769
  %v1966 = vsel %vm903, %v1950, %v1771
  %v1967 = vsel %vm903, %v1951, %v1773
  %v1968 = vsel %vm903, %v1952, %v1775
  %v1969 = vsel %vm903, %v1953, %v1777
  %v1970 = vsel %vm903, %v1954, %v1779
  %v1971 = vsel %vm903, %v1955, %v1779
  %vm1972 = vcmask 343040
  %v1973 = vsel %vm1972, %v1956, %v1795
  %v1974 = vsel %vm1972, %v1957, %v1797
  %v1975 = vsel %vm1972, %v1958, %v1799
  %v1976 = vsel %vm1972, %v1959, %v1801
  %v1977 = vsel %vm1972, %v1960, %v1803
  %v1978 = vsel %vm1972, %v1961, %v1805
  %v1979 = vsel %vm1972, %v1962, %v1807
  %v1980 = vsel %vm1972, %v1963, %v1807
  %v1981 = vsel %vm1972, %v1964, %v1809
  %v1982 = vsel %vm1972, %v1965, %v1811
  %v1983 = vsel %vm1972, %v1966, %v1813
  %v1984 = vsel %vm1972, %v1967, %v1815
  %v1985 = vsel %vm1972, %v1968, %v1817
  %v1986 = vsel %vm1972, %v1969, %v1819
  %v1987 = vsel %vm1972, %v1970, %v1821
  %v1988 = vsel %vm1972, %v1971, %v1821
  %vm1989 = vcmask 392192
  %v1990 = vsel %vm1989, %v1973, %v1837
  %v1991 = vsel %vm1989, %v1974, %v1839
  %v1992 = vsel %vm1989, %v1975, %v1841
  %v1993 = vsel %vm1989, %v1976, %v1843
  %v1994 = vsel %vm1989, %v1977, %v1845
  %v1995 = vsel %vm1989, %v1978, %v1847
  %v1996 = vsel %vm1989, %v1979, %v1849
  %v1997 = vsel %vm1989, %v1980, %v1849
  %v1998 = vsel %vm1989, %v1981, %v1851
  %v1999 = vsel %vm1989, %v1982, %v1853
  %v2000 = vsel %vm1989, %v1983, %v1855
  %v2001 = vsel %vm1989, %v1984, %v1857
  %v2002 = vsel %vm1989, %v1985, %v1859
  %v2003 = vsel %vm1989, %v1986, %v1861
  %v2004 = vsel %vm1989, %v1987, %v1863
  %v2005 = vsel %vm1989, %v1988, %v1863
  %v2007 = vlaneseq
  %v2008 = vshrl.u32 %v2007, 7
  %v2009 = vsub.s32 0, %v2008
  %v2010 = vrot.slane %v1281, %v2009
  %vm2012 = vcmask 441344
  %v2014 = vsel %vm2012, %v1990, 0
  %v2017 = vsel %vm2012, %v1991, 0
  %v2020 = vsel %vm2012, %v1992, 0
  %v2023 = vsel %vm2012, %v1993, 0
  %v2026 = vsel %vm2012, %v1994, 0
  %v2029 = vsel %vm2012, %v1995, 0
  %v2032 = vsel %vm2012, %v1996, 0
  %v2035 = vsel %vm2012, %v1997, 0
  %v2038 = vsel %vm2012, %v1998, 0
  %v2041 = vsel %vm2012, %v1999, 0
  %v2044 = vsel %vm2012, %v2000, 0
  %v2047 = vsel %vm2012, %v2001, 0
  %v2050 = vsel %vm2012, %v2002, 0
  %v2053 = vsel %vm2012, %v2003, 0
  %v2056 = vsel %vm2012, %v2004, 0
  %v2059 = vsel %vm2012, %v2005, 0
  %v2062 = vsel %vm394, %v1280, 0
  %2064 = vmatprep.subr.mxu0 0.0
  %2065 = vmatpush1.msra.mxu0 %v1274
  %2066 = vmatprep.subr.mxu0 0.0
  %2067 = vmatpush1.msra.mxu0 %v1275
  %2068 = vmatprep.subr.mxu0 0.0
  %2069 = vmatpush1.msra.mxu0 %v1276
  %2070 = vmatprep.subr.mxu0 0.0
  %2071 = vmatpush1.msra.mxu0 %v1277
  %2072 = vmatprep.subr.mxu0 0.0
  %2073 = vmatpush1.msra.mxu0 %v1278
  %2074 = vmatprep.subr.mxu0 0.0
  %2075 = vmatpush1.msra.mxu0 %v1279
  %2076 = vmatprep.subr.mxu0 0.0
  %2077 = vmatpush1.msra.mxu0 %v2062
  %2078 = vmatprep.subr.mxu0 0.0
  %2079 = vmatpush1.msra.mxu0 0.0
  %2080 = vmatprep.subr.mxu0 0.0
  %2081 = vmatpush1.msra.mxu0 0.0
  %2082 = vmatprep.subr.mxu0 0.0
  %2083 = vmatpush1.msra.mxu0 0.0
  %2084 = vmatprep.subr.mxu0 0.0
  %2085 = vmatpush1.msra.mxu0 0.0
  %2086 = vmatprep.subr.mxu0 0.0
  %2087 = vmatpush1.msra.mxu0 0.0
  %2088 = vmatprep.subr.mxu0 0.0
  %2089 = vmatpush1.msra.mxu0 0.0
  %2090 = vmatprep.subr.mxu0 0.0
  %2091 = vmatpush1.msra.mxu0 0.0
  %2092 = vmatprep.subr.mxu0 0.0
  %2093 = vmatpush1.msra.mxu0 0.0
  %2094 = vmatprep.subr.mxu0 0.0
  %2095 = vmatpush1.msra.mxu0 0.0
  %2096 = vmatprep.subr.mxu0 0.0
  %2097 = vmatpush1.msra.mxu0 0.0
  %2098 = vmatprep.subr.mxu0 0.0
  %2099 = vmatpush1.msra.mxu0 0.0
  %2100 = vmatprep.subr.mxu0 0.0
  %2101 = vmatpush1.msra.mxu0 0.0
  %2102 = vmatprep.subr.mxu0 0.0
  %2103 = vmatpush1.msra.mxu0 0.0
  %2104 = vmatprep.subr.mxu0 0.0
  %2105 = vmatpush1.msra.mxu0 0.0
  %2106 = vmatprep.subr.mxu0 0.0
  %2107 = vmatpush1.msra.mxu0 0.0
  %2108 = vmatprep.subr.mxu0 0.0
  %2109 = vmatpush1.msra.mxu0 0.0
  %2110 = vmatprep.subr.mxu0 0.0
  %2111 = vmatpush1.msra.mxu0 0.0
  %2112 = vmatprep.subr.mxu0 0.0
  %2113 = vmatpush1.msra.mxu0 0.0
  %2114 = vmatprep.subr.mxu0 0.0
  %2115 = vmatpush1.msra.mxu0 0.0
  %2116 = vmatprep.subr.mxu0 0.0
  %2117 = vmatpush1.msra.mxu0 0.0
  %2118 = vmatprep.subr.mxu0 0.0
  %2119 = vmatpush1.msra.mxu0 0.0
  %2120 = vmatprep.subr.mxu0 0.0
  %2121 = vmatpush1.msra.mxu0 0.0
  %2122 = vmatprep.subr.mxu0 0.0
  %2123 = vmatpush1.msra.mxu0 0.0
  %2124 = vmatprep.subr.mxu0 0.0
  %2125 = vmatpush1.msra.mxu0 0.0
  %2126 = vmatprep.subr.mxu0 0.0
  %2127 = vmatpush1.msra.mxu0 0.0
  %2128 = vmatprep.mubr.f32.mxu0 0.0
  %2129 = vmatmul.mubr.f32.gmra.mrb[0].mxu0 %v2014
  %v2130 = vpop.f32.mrb[0].mxu0
  %v2131 = vadd.f32 %v2010, %v2130
  %v2132 = vpop.f32.mrb[0].mxu0
  %2133 = vmatprep.mubr.f32.mxu0 0.0
  %2134 = vmatmul.mubr.f32.gmra.mrb[0].mxu0 %v2017
  %v2135 = vpop.f32.mrb[0].mxu0
  %v2136 = vadd.f32 %v2010, %v2135
  %v2137 = vpop.f32.mrb[0].mxu0
  %2138 = vmatprep.mubr.f32.mxu0 0.0
  %2139 = vmatmul.mubr.f32.gmra.mrb[0].mxu0 %v2020
  %v2140 = vpop.f32.mrb[0].mxu0
  %v2141 = vadd.f32 %v2010, %v2140
  %v2142 = vpop.f32.mrb[0].mxu0
  %2143 = vmatprep.mubr.f32.mxu0 0.0
  %2144 = vmatmul.mubr.f32.gmra.mrb[0].mxu0 %v2023
  %v2145 = vpop.f32.mrb[0].mxu0
  %v2146 = vadd.f32 %v2010, %v2145
  %v2147 = vpop.f32.mrb[0].mxu0
  %2148 = vmatprep.mubr.f32.mxu0 0.0
  %2149 = vmatmul.mubr.f32.gmra.mrb[0].mxu0 %v2026
  %v2150 = vpop.f32.mrb[0].mxu0
  %v2151 = vadd.f32 %v2010, %v2150
  %v2152 = vpop.f32.mrb[0].mxu0
  %2153 = vmatprep.mubr.f32.mxu0 0.0
  %2154 = vmatmul.mubr.f32.gmra.mrb[0].mxu0 %v2029
  %v2155 = vpop.f32.mrb[0].mxu0
  %v2156 = vadd.f32 %v2010, %v2155
  %v2157 = vpop.f32.mrb[0].mxu0
  %2158 = vmatprep.mubr.f32.mxu0 0.0
  %2159 = vmatmul.mubr.f32.gmra.mrb[0].mxu0 %v2032
  %v2160 = vpop.f32.mrb[0].mxu0
  %v2161 = vadd.f32 %v2010, %v2160
  %v2162 = vpop.f32.mrb[0].mxu0
  %2163 = vmatprep.mubr.f32.mxu0 0.0
  %2164 = vmatmul.mubr.f32.gmra.mrb[0].mxu0 %v2035
  %v2165 = vpop.f32.mrb[0].mxu0
  %v2166 = vadd.f32 %v2010, %v2165
  %v2167 = vpop.f32.mrb[0].mxu0
  %2168 = vmatprep.mubr.f32.mxu0 0.0
  %2169 = vmatmul.mubr.f32.gmra.mrb[0].mxu0 %v2038
  %v2170 = vpop.f32.mrb[0].mxu0
  %v2171 = vadd.f32 %v2010, %v2170
  %v2172 = vpop.f32.mrb[0].mxu0
  %2173 = vmatprep.mubr.f32.mxu0 0.0
  %2174 = vmatmul.mubr.f32.gmra.mrb[0].mxu0 %v2041
  %v2175 = vpop.f32.mrb[0].mxu0
  %v2176 = vadd.f32 %v2010, %v2175
  %v2177 = vpop.f32.mrb[0].mxu0
  %2178 = vmatprep.mubr.f32.mxu0 0.0
  %2179 = vmatmul.mubr.f32.gmra.mrb[0].mxu0 %v2044
  %v2180 = vpop.f32.mrb[0].mxu0
  %v2181 = vadd.f32 %v2010, %v2180
  %v2182 = vpop.f32.mrb[0].mxu0
  %2183 = vmatprep.mubr.f32.mxu0 0.0
  %2184 = vmatmul.mubr.f32.gmra.mrb[0].mxu0 %v2047
  %v2185 = vpop.f32.mrb[0].mxu0
  %v2186 = vadd.f32 %v2010, %v2185
  %v2187 = vpop.f32.mrb[0].mxu0
  %2188 = vmatprep.mubr.f32.mxu0 0.0
  %2189 = vmatmul.mubr.f32.gmra.mrb[0].mxu0 %v2050
  %v2190 = vpop.f32.mrb[0].mxu0
  %v2191 = vadd.f32 %v2010, %v2190
  %v2192 = vpop.f32.mrb[0].mxu0
  %2193 = vmatprep.mubr.f32.mxu0 0.0
  %2194 = vmatmul.mubr.f32.gmra.mrb[0].mxu0 %v2053
  %v2195 = vpop.f32.mrb[0].mxu0
  %v2196 = vadd.f32 %v2010, %v2195
  %v2197 = vpop.f32.mrb[0].mxu0
  %2198 = vmatprep.mubr.f32.mxu0 0.0
  %2199 = vmatmul.mubr.f32.gmra.mrb[0].mxu0 %v2056
  %v2200 = vpop.f32.mrb[0].mxu0
  %v2201 = vadd.f32 %v2010, %v2200
  %v2202 = vpop.f32.mrb[0].mxu0
  %2203 = vmatprep.mubr.f32.mxu0 0.0
  %2204 = vmatmul.mubr.f32.gmra.mrb[0].mxu0 %v2059
  %v2205 = vpop.f32.mrb[0].mxu0
  %v2206 = vadd.f32 %v2010, %v2205
  %v2207 = vpop.f32.mrb[0].mxu0
  %2208 = vdwg.mxu0
  %v2209 = vsel %vm780, %v2131, 0.0
  %v2210 = vsel %vm780, %v2136, 0.0
  %v2211 = vadd.f32 %v2209, %v2210
  %v2212 = vsel %vm780, %v2141, 0.0
  %v2213 = vadd.f32 %v2211, %v2212
  %v2214 = vsel %vm780, %v2146, 0.0
  %v2215 = vadd.f32 %v2213, %v2214
  %v2216 = vsel %vm780, %v2151, 0.0
  %v2217 = vadd.f32 %v2215, %v2216
  %v2218 = vsel %vm780, %v2156, 0.0
  %v2219 = vadd.f32 %v2217, %v2218
  %v2220 = vsel %vm780, %v2161, 0.0
  %v2221 = vadd.f32 %v2219, %v2220
  %v2222 = vsel %vm780, %v2166, 0.0
  %v2223 = vadd.f32 %v2221, %v2222
  %v2224 = vsel %vm780, %v2171, 0.0
  %v2225 = vadd.f32 %v2223, %v2224
  %v2226 = vsel %vm780, %v2176, 0.0
  %v2227 = vadd.f32 %v2225, %v2226
  %v2228 = vsel %vm780, %v2181, 0.0
  %v2229 = vadd.f32 %v2227, %v2228
  %v2230 = vsel %vm780, %v2186, 0.0
  %v2231 = vadd.f32 %v2229, %v2230
  %v2232 = vsel %vm780, %v2191, 0.0
  %v2233 = vadd.f32 %v2231, %v2232
  %v2234 = vsel %vm780, %v2196, 0.0
  %v2235 = vadd.f32 %v2233, %v2234
  %v2236 = vsel %vm780, %v2201, 0.0
  %v2237 = vadd.f32 %v2235, %v2236
  %v2238 = vsel %vm780, %v2206, 0.0
  %v2239 = vadd.f32 %v2237, %v2238
  %v2240 = vrot.slane %v2239, 4
  %v2241 = vadd.f32 %v2239, %v2240
  %v2242 = vrot.slane %v2241, 2
  %v2243 = vadd.f32 %v2241, %v2242
  %v2244 = vrot.slane %v2243, 1
  %v2245 = vadd.f32 %v2243, %v2244
  %v2246 = vmul.f32 %v2131, %v2131
  %v2247 = vmul.f32 %v2136, %v2136
  %v2248 = vmul.f32 %v2141, %v2141
  %v2249 = vmul.f32 %v2146, %v2146
  %v2250 = vmul.f32 %v2151, %v2151
  %v2251 = vmul.f32 %v2156, %v2156
  %v2252 = vmul.f32 %v2161, %v2161
  %v2253 = vmul.f32 %v2166, %v2166
  %v2254 = vmul.f32 %v2171, %v2171
  %v2255 = vmul.f32 %v2176, %v2176
  %v2256 = vmul.f32 %v2181, %v2181
  %v2257 = vmul.f32 %v2186, %v2186
  %v2258 = vmul.f32 %v2191, %v2191
  %v2259 = vmul.f32 %v2196, %v2196
  %v2260 = vmul.f32 %v2201, %v2201
  %v2261 = vmul.f32 %v2206, %v2206
  %v2262 = vsel %vm780, %v2246, 0.0
  %v2263 = vsel %vm780, %v2247, 0.0
  %v2264 = vadd.f32 %v2262, %v2263
  %v2265 = vsel %vm780, %v2248, 0.0
  %v2266 = vadd.f32 %v2264, %v2265
  %v2267 = vsel %vm780, %v2249, 0.0
  %v2268 = vadd.f32 %v2266, %v2267
  %v2269 = vsel %vm780, %v2250, 0.0
  %v2270 = vadd.f32 %v2268, %v2269
  %v2271 = vsel %vm780, %v2251, 0.0
  %v2272 = vadd.f32 %v2270, %v2271
  %v2273 = vsel %vm780, %v2252, 0.0
  %v2274 = vadd.f32 %v2272, %v2273
  %v2275 = vsel %vm780, %v2253, 0.0
  %v2276 = vadd.f32 %v2274, %v2275
  %v2277 = vsel %vm780, %v2254, 0.0
  %v2278 = vadd.f32 %v2276, %v2277
  %v2279 = vsel %vm780, %v2255, 0.0
  %v2280 = vadd.f32 %v2278, %v2279
  %v2281 = vsel %vm780, %v2256, 0.0
  %v2282 = vadd.f32 %v2280, %v2281
  %v2283 = vsel %vm780, %v2257, 0.0
  %v2284 = vadd.f32 %v2282, %v2283
  %v2285 = vsel %vm780, %v2258, 0.0
  %v2286 = vadd.f32 %v2284, %v2285
  %v2287 = vsel %vm780, %v2259, 0.0
  %v2288 = vadd.f32 %v2286, %v2287
  %v2289 = vsel %vm780, %v2260, 0.0
  %v2290 = vadd.f32 %v2288, %v2289
  %v2291 = vsel %vm780, %v2261, 0.0
  %v2292 = vadd.f32 %v2290, %v2291
  %v2293 = vrot.slane %v2292, 4
  %v2294 = vadd.f32 %v2292, %v2293
  %v2295 = vrot.slane %v2294, 2
  %v2296 = vadd.f32 %v2294, %v2295
  %v2297 = vrot.slane %v2296, 1
  %v2298 = vadd.f32 %v2296, %v2297
  %v2299 = vmul.f32 %v2245, 0.0078125
  %v2300 = vmul.f32 %v2298, 0.0078125
  %v2301 = vmul.f32 %v2299, %v2299
  %v2302 = vsub.f32 %v2300, %v2301
  %v2303 = vsub.f32 %v2131, %v2299
  %v2304 = vsub.f32 %v2136, %v2299
  %v2305 = vsub.f32 %v2141, %v2299
  %v2306 = vsub.f32 %v2146, %v2299
  %v2307 = vsub.f32 %v2151, %v2299
  %v2308 = vsub.f32 %v2156, %v2299
  %v2309 = vsub.f32 %v2161, %v2299
  %v2310 = vsub.f32 %v2166, %v2299
  %v2311 = vsub.f32 %v2171, %v2299
  %v2312 = vsub.f32 %v2176, %v2299
  %v2313 = vsub.f32 %v2181, %v2299
  %v2314 = vsub.f32 %v2186, %v2299
  %v2315 = vsub.f32 %v2191, %v2299
  %v2316 = vsub.f32 %v2196, %v2299
  %v2317 = vsub.f32 %v2201, %v2299
  %v2318 = vsub.f32 %v2206, %v2299
  %v2319 = vadd.f32 %v2302, 1e-05
  %v2320 = vrsqrt.pop %v2319
  %v2321 = vmul.f32 %v2303, %v2320
  %v2322 = vmul.f32 %v2304, %v2320
  %v2323 = vmul.f32 %v2305, %v2320
  %v2324 = vmul.f32 %v2306, %v2320
  %v2325 = vmul.f32 %v2307, %v2320
  %v2326 = vmul.f32 %v2308, %v2320
  %v2327 = vmul.f32 %v2309, %v2320
  %v2328 = vmul.f32 %v2310, %v2320
  %v2329 = vmul.f32 %v2311, %v2320
  %v2330 = vmul.f32 %v2312, %v2320
  %v2331 = vmul.f32 %v2313, %v2320
  %v2332 = vmul.f32 %v2314, %v2320
  %v2333 = vmul.f32 %v2315, %v2320
  %v2334 = vmul.f32 %v2316, %v2320
  %v2335 = vmul.f32 %v2317, %v2320
  %v2336 = vmul.f32 %v2318, %v2320
  %v2338 = vlaneseq
  %v2339 = vshrl.u32 %v2338, 7
  %v2340 = vsub.s32 0, %v2339
  %v2341 = vrot.slane %v1282, %v2340
  %v2343 = vmul.f32 %v2321, %v2341
  %v2344 = vmul.f32 %v2322, %v2341
  %v2345 = vmul.f32 %v2323, %v2341
  %v2346 = vmul.f32 %v2324, %v2341
  %v2347 = vmul.f32 %v2325, %v2341
  %v2348 = vmul.f32 %v2326, %v2341
  %v2349 = vmul.f32 %v2327, %v2341
  %v2350 = vmul.f32 %v2328, %v2341
  %v2351 = vmul.f32 %v2329, %v2341
  %v2352 = vmul.f32 %v2330, %v2341
  %v2353 = vmul.f32 %v2331, %v2341
  %v2354 = vmul.f32 %v2332, %v2341
  %v2355 = vmul.f32 %v2333, %v2341
  %v2356 = vmul.f32 %v2334, %v2341
  %v2357 = vmul.f32 %v2335, %v2341
  %v2358 = vmul.f32 %v2336, %v2341
  %v2360 = vlaneseq
  %v2361 = vshrl.u32 %v2360, 7
  %v2362 = vsub.s32 0, %v2361
  %v2363 = vrot.slane %v1283, %v2362
  %v2365 = vadd.f32 %v2343, %v2363
  %v2366 = vadd.f32 %v2344, %v2363
  %v2367 = vadd.f32 %v2345, %v2363
  %v2368 = vadd.f32 %v2346, %v2363
  %v2369 = vadd.f32 %v2347, %v2363
  %v2370 = vadd.f32 %v2348, %v2363
  %v2371 = vadd.f32 %v2349, %v2363
  %v2372 = vadd.f32 %v2350, %v2363
  %v2373 = vadd.f32 %v2351, %v2363
  %v2374 = vadd.f32 %v2352, %v2363
  %v2375 = vadd.f32 %v2353, %v2363
  %v2376 = vadd.f32 %v2354, %v2363
  %v2377 = vadd.f32 %v2355, %v2363
  %v2378 = vadd.f32 %v2356, %v2363
  %v2379 = vadd.f32 %v2357, %v2363
  %v2380 = vadd.f32 %v2358, %v2363
  %v2381 = vxor.u32 %v2365, 2147483648
  %v2382 = vxor.u32 %v2366, 2147483648
  %v2383 = vxor.u32 %v2367, 2147483648
  %v2384 = vxor.u32 %v2368, 2147483648
  %v2385 = vxor.u32 %v2369, 2147483648
  %v2386 = vxor.u32 %v2370, 2147483648
  %v2387 = vxor.u32 %v2371, 2147483648
  %v2388 = vxor.u32 %v2372, 2147483648
  %v2389 = vxor.u32 %v2373, 2147483648
  %v2390 = vxor.u32 %v2374, 2147483648
  %v2391 = vxor.u32 %v2375, 2147483648
  %v2392 = vxor.u32 %v2376, 2147483648
  %v2393 = vxor.u32 %v2377, 2147483648
  %v2394 = vxor.u32 %v2378, 2147483648
  %v2395 = vxor.u32 %v2379, 2147483648
  %v2396 = vxor.u32 %v2380, 2147483648
  %v2397 = vmul.f32 %v2381, 1.442695
  %v2398 = vpow.pop %v2397
  %v2399 = vmul.f32 %v2382, 1.442695
  %v2400 = vpow.pop %v2399
  %v2401 = vmul.f32 %v2383, 1.442695
  %v2402 = vpow.pop %v2401
  %v2403 = vmul.f32 %v2384, 1.442695
  %v2404 = vpow.pop %v2403
  %v2405 = vmul.f32 %v2385, 1.442695
  %v2406 = vpow.pop %v2405
  %v2407 = vmul.f32 %v2386, 1.442695
  %v2408 = vpow.pop %v2407
  %v2409 = vmul.f32 %v2387, 1.442695
  %v2410 = vpow.pop %v2409
  %v2411 = vmul.f32 %v2388, 1.442695
  %v2412 = vpow.pop %v2411
  %v2413 = vmul.f32 %v2389, 1.442695
  %v2414 = vpow.pop %v2413
  %v2415 = vmul.f32 %v2390, 1.442695
  %v2416 = vpow.pop %v2415
  %v2417 = vmul.f32 %v2391, 1.442695
  %v2418 = vpow.pop %v2417
  %v2419 = vmul.f32 %v2392, 1.442695
  %v2420 = vpow.pop %v2419
  %v2421 = vmul.f32 %v2393, 1.442695
  %v2422 = vpow.pop %v2421
  %v2423 = vmul.f32 %v2394, 1.442695
  %v2424 = vpow.pop %v2423
  %v2425 = vmul.f32 %v2395, 1.442695
  %v2426 = vpow.pop %v2425
  %v2427 = vmul.f32 %v2396, 1.442695
  %v2428 = vpow.pop %v2427
  %v2429 = vadd.f32 %v2398, 1.0
  %v2430 = vadd.f32 %v2400, 1.0
  %v2431 = vadd.f32 %v2402, 1.0
  %v2432 = vadd.f32 %v2404, 1.0
  %v2433 = vadd.f32 %v2406, 1.0
  %v2434 = vadd.f32 %v2408, 1.0
  %v2435 = vadd.f32 %v2410, 1.0
  %v2436 = vadd.f32 %v2412, 1.0
  %v2437 = vadd.f32 %v2414, 1.0
  %v2438 = vadd.f32 %v2416, 1.0
  %v2439 = vadd.f32 %v2418, 1.0
  %v2440 = vadd.f32 %v2420, 1.0
  %v2441 = vadd.f32 %v2422, 1.0
  %v2442 = vadd.f32 %v2424, 1.0
  %v2443 = vadd.f32 %v2426, 1.0
  %v2444 = vadd.f32 %v2428, 1.0
  %v2445 = vrcp.pop %v2429
  %v2446 = vmul.f32 1.0, %v2445
  %v2447 = vrcp.pop %v2430
  %v2448 = vmul.f32 1.0, %v2447
  %v2449 = vrcp.pop %v2431
  %v2450 = vmul.f32 1.0, %v2449
  %v2451 = vrcp.pop %v2432
  %v2452 = vmul.f32 1.0, %v2451
  %v2453 = vrcp.pop %v2433
  %v2454 = vmul.f32 1.0, %v2453
  %v2455 = vrcp.pop %v2434
  %v2456 = vmul.f32 1.0, %v2455
  %v2457 = vrcp.pop %v2435
  %v2458 = vmul.f32 1.0, %v2457
  %v2459 = vrcp.pop %v2436
  %v2460 = vmul.f32 1.0, %v2459
  %v2461 = vrcp.pop %v2437
  %v2462 = vmul.f32 1.0, %v2461
  %v2463 = vrcp.pop %v2438
  %v2464 = vmul.f32 1.0, %v2463
  %v2465 = vrcp.pop %v2439
  %v2466 = vmul.f32 1.0, %v2465
  %v2467 = vrcp.pop %v2440
  %v2468 = vmul.f32 1.0, %v2467
  %v2469 = vrcp.pop %v2441
  %v2470 = vmul.f32 1.0, %v2469
  %v2471 = vrcp.pop %v2442
  %v2472 = vmul.f32 1.0, %v2471
  %v2473 = vrcp.pop %v2443
  %v2474 = vmul.f32 1.0, %v2473
  %v2475 = vrcp.pop %v2444
  %v2476 = vmul.f32 1.0, %v2475
  %2477 = vst.msk [vmem:[%s9] sm:$0xff] %vm780, %v2446
  %2478 = vst.msk [vmem:[%s9 + $0x8] sm:$0xff] %vm780, %v2448
  %2479 = vst.msk [vmem:[%s9 + $0x10] sm:$0xff] %vm780, %v2450
  %2480 = vst.msk [vmem:[%s9 + $0x18] sm:$0xff] %vm780, %v2452
  %2481 = vst.msk [vmem:[%s9 + $0x20] sm:$0xff] %vm780, %v2454
  %2482 = vst.msk [vmem:[%s9 + $0x28] sm:$0xff] %vm780, %v2456
  %2483 = vst.msk [vmem:[%s9 + $0x30] sm:$0xff] %vm780, %v2458
  %2484 = vst.msk [vmem:[%s9 + $0x38] sm:$0xff] %vm780, %v2460
  %2485 = vst.msk [vmem:[%s9 + $0x40] sm:$0xff] %vm780, %v2462
  %2486 = vst.msk [vmem:[%s9 + $0x48] sm:$0xff] %vm780, %v2464
  %2487 = vst.msk [vmem:[%s9 + $0x50] sm:$0xff] %vm780, %v2466
  %2488 = vst.msk [vmem:[%s9 + $0x58] sm:$0xff] %vm780, %v2468
  %2489 = vst.msk [vmem:[%s9 + $0x60] sm:$0xff] %vm780, %v2470
  %2490 = vst.msk [vmem:[%s9 + $0x68] sm:$0xff] %vm780, %v2472
  %2491 = vst.msk [vmem:[%s9 + $0x70] sm:$0xff] %vm780, %v2474
  %2492 = vst.msk [vmem:[%s9 + $0x78] sm:$0xff] %vm780, %v2476
  // Predicated region
  $region38: #{down_forward.1} parent=0 // pred_check
    _
  $region39: #{down_forward.1} parent=0 // pred_check_branch
    %2494 = sbr.rel (0) target = $region41
  $region40: #{down_forward.1} parent=0 // pred_region
    _
  $region41: #{down_forward.1} parent=0 // pred_fallthru
    _
  // Predicated region
  $region42: #{down_forward.1} parent=0 // pred_check
    _
  $region43: #{down_forward.1} parent=0 // pred_check_branch
    %2496 = sbr.rel (0) target = $region45
  $region44: #{down_forward.1} parent=0 // pred_region
    _
  $region45: #{down_forward.1} parent=0 // pred_fallthru
    _

</llo_original>
